<compile_context>
chip_gen: v5e
topology: v5e:2x2
jax: 0.10.0
libtpu: 0.0.40
codegen_flags: <defaults>
</compile_context>

<pallas_src>
import math
import functools

import jax
import jax.numpy as jnp
from jax.experimental import pallas as pl
from jax.experimental.pallas import tpu as pltpu


def _round_up(n: int, m: int) -> int:
    return ((n + m - 1) // m) * m


def _fold_factor(input_dim: int, embedding_dim: int) -> int:
    """Smallest F s.t. F*input_dim and F*embedding_dim are both multiples of 128."""
    f_in = 128 // math.gcd(128, input_dim)
    f_out = 128 // math.gcd(128, embedding_dim)
    return (f_in * f_out) // math.gcd(f_in, f_out)


def _mlp_folded_kernel(x_ref, w1_ref, b1_ref, w2_ref, b2_ref, w3_ref, b3_ref, o_ref):
    # x_ref: (tbf, F*input_dim) f32 -- F original rows per folded row, lane-dense.
    # w*_ref are block-diagonal kron(I_F, W) weights, so each matmul applies the
    # original Linear to every original row independently; b*_ref are tiled biases.
    x = x_ref[...]
    h = jnp.dot(x, w1_ref[...], preferred_element_type=jnp.float32) + b1_ref[...]
    h = jnp.maximum(h, 0.0)
    # (Dropout -> identity at inference)
    h = jnp.dot(h, w2_ref[...], preferred_element_type=jnp.float32) + b2_ref[...]
    h = jnp.maximum(h, 0.0)
    # (Dropout -> identity at inference)
    out = jnp.dot(h, w3_ref[...], preferred_element_type=jnp.float32) + b3_ref[...]
    o_ref[...] = out.astype(o_ref.dtype)


def content_encoder_forward(x, params, *, block_rows: int = 8192):
    """x: (batch, input_dim) float32.  params: dict of w1,b1,w2,b2,w3,b3 (f32)."""
    w1, b1, w2, b2, w3, b3 = (params["w1"], params["b1"], params["w2"],
                              params["b2"], params["w3"], params["b3"])
    batch, input_dim = x.shape
    emb_dim = w3.shape[1]

    F = _fold_factor(input_dim, emb_dim)
    if F > 32:
        # TODO(synk): fall back to an unfolded (lane-padded) kernel for awkward dims.
        raise NotImplementedError(f"fold factor {F} too large for resident kron weights")

    # Block-diagonal ("folded") weights: kron(I_F, W) and tiled biases. Built once per
    # call (tiny); in a real model these would be precomputed/cached alongside params.
    eye = jnp.eye(F, dtype=jnp.float32)
    w1f = jnp.kron(eye, w1.astype(jnp.float32))
    w2f = jnp.kron(eye, w2.astype(jnp.float32))
    w3f = jnp.kron(eye, w3.astype(jnp.float32))
    b1f = jnp.tile(b1.reshape(1, -1).astype(jnp.float32), (1, F))
    b2f = jnp.tile(b2.reshape(1, -1).astype(jnp.float32), (1, F))
    b3f = jnp.tile(b3.reshape(1, -1).astype(jnp.float32), (1, F))

    # Pad only to the fold alignment (at most F-1 extra rows); tile raggedness within
    # the grid is handled by Pallas' partial-final-block masking, not by padding.
    padded = _round_up(batch, F)
    if padded != batch:
        x = jnp.pad(x, ((0, padded - batch), (0, 0)))
    R = padded // F                                   # folded rows
    xf = x.reshape(R, F * input_dim)                  # lane-dense: last dim % 128 == 0

    # Folded batch tile: big (amortizes ~0.35us/step), 8-sublane aligned, or the full
    # folded extent for small batches (full-extent blocks are exempt from (8,128)).
    tbf_target = max(8, _round_up(max(block_rows // F, 1), 8))
    tbf = R if R <= tbf_target else tbf_target
    grid = (pl.cdiv(R, tbf),)

    def resident_spec(shape):
        # Constant index_map -> same block every step -> DMA'd once, VMEM-resident.
        n = len(shape)
        return pl.BlockSpec(shape, lambda i, _n=n: (0,) * _n)

    out_folded = pl.pallas_call(
        _mlp_folded_kernel,
        out_shape=jax.ShapeDtypeStruct((R, F * emb_dim), jnp.float32),
        grid=grid,
        in_specs=[
            pl.BlockSpec((tbf, F * input_dim), lambda i: (i, 0)),   # x streams by tile
            resident_spec(w1f.shape), resident_spec(b1f.shape),
            resident_spec(w2f.shape), resident_spec(b2f.shape),
            resident_spec(w3f.shape), resident_spec(b3f.shape),
        ],
        out_specs=pl.BlockSpec((tbf, F * emb_dim), lambda i: (i, 0)),
        compiler_params=pltpu.CompilerParams(
            dimension_semantics=("parallel",),          # megacore on v7x
            vmem_limit_bytes=32 * 1024 * 1024),
    )(xf, w1f, b1f, w2f, b2f, w3f, b3f)

    out = out_folded.reshape(padded, emb_dim)
    return out[:batch] if padded != batch else out


def init_content_encoder_params(key, input_dim, embedding_dim, hidden_dims=(64, 32)):
    """Xavier-uniform weights (as in the PyTorch _init_weights), zero biases."""
    layer_dims = [input_dim] + list(hidden_dims) + [embedding_dim]
    params = {}
    keys = jax.random.split(key, len(layer_dims) - 1)
    for i, (fan_in, fan_out) in enumerate(zip(layer_dims[:-1], layer_dims[1:])):
        bound = (6.0 / (fan_in + fan_out)) ** 0.5
        w = jax.random.uniform(keys[i], (fan_in, fan_out),
                               minval=-bound, maxval=bound, dtype=jnp.float32)
        b = jnp.zeros((1, fan_out), dtype=jnp.float32)   # kept 2D for TPU layout
        params[f"w{i+1}"] = w
        params[f"b{i+1}"] = b
    return params


def reference_forward(x, params):
    """Plain-JAX f32 reference (eval-mode semantics) for correctness checking."""
    h = jnp.maximum(x @ params["w1"] + params["b1"], 0.0)
    h = jnp.maximum(h @ params["w2"] + params["b2"], 0.0)
    return h @ params["w3"] + params["b3"]


if __name__ == "__main__":
    key = jax.random.PRNGKey(0)
    k_param, k_data1, k_data2 = jax.random.split(key, 3)

    input_dim, embedding_dim = 16, 8
    hidden_dims = (64, 32)
    params = init_content_encoder_params(k_param, input_dim, embedding_dim, hidden_dims)

    # --- Small default test (single grid step, fold-alignment padding path) ---
    batch_small = 24
    x_small = jax.random.normal(k_data1, (batch_small, input_dim), dtype=jnp.float32)
    fwd_default = jax.jit(functools.partial(content_encoder_forward, block_rows=8192))
    out_small = jax.block_until_ready(fwd_default(x_small, params))
    ref_small = reference_forward(x_small, params)
    assert out_small.shape == (batch_small, embedding_dim), out_small.shape
    assert jnp.allclose(out_small, ref_small, atol=3e-2, rtol=3e-2), "mismatch (small)"

    # --- Multi-step grid + partial final block + fold padding ---
    batch_big = 200   # not a multiple of F=16 -> exercises alignment pad + masked tail
    x_big = jax.random.normal(k_data2, (batch_big, input_dim), dtype=jnp.float32)
    fwd_tiled = jax.jit(functools.partial(content_encoder_forward, block_rows=128))
    out_big_tiled = jax.block_until_ready(fwd_tiled(x_big, params))
    out_big_single = jax.block_until_ready(fwd_default(x_big, params))
    ref_big = reference_forward(x_big, params)
    assert out_big_tiled.shape == (batch_big, embedding_dim), out_big_tiled.shape
    assert jnp.allclose(out_big_tiled, ref_big, atol=3e-2, rtol=3e-2), "mismatch (tiled)"
    assert jnp.allclose(out_big_single, ref_big, atol=3e-2, rtol=3e-2), "mismatch (single)"
    assert jnp.allclose(out_big_tiled, out_big_single, atol=1e-5, rtol=1e-5), \
        "tiling changed result"

    print("KERNEL_OK")
</pallas_src>

<mosaic_0001>
module attributes {stable_mosaic.version = 11 : i64} {
  func.func @_mlp_folded_kernel(%arg0: i32, %arg1: memref<2x256xf32, #tpu.memory_space<vmem>>, %arg2: memref<256x1024xf32, #tpu.memory_space<vmem>>, %arg3: memref<1x1024xf32, #tpu.memory_space<vmem>>, %arg4: memref<1024x512xf32, #tpu.memory_space<vmem>>, %arg5: memref<1x512xf32, #tpu.memory_space<vmem>>, %arg6: memref<512x128xf32, #tpu.memory_space<vmem>>, %arg7: memref<1x128xf32, #tpu.memory_space<vmem>>, %arg8: memref<2x128xf32, #tpu.memory_space<vmem>>) attributes {dimension_semantics = [#tpu.dimension_semantics<parallel>], iteration_bounds = array<i64: 1>, scalar_prefetch = 0 : i64, scratch_operands = 0 : i64, tpu.core_type = #tpu.core_type<tc>, window_params = [{transform_indices = @transform_0, window_bounds = array<i64: 2, 256>}, {pipeline_mode = #tpu.pipeline_mode<synchronous>, transform_indices = @transform_1, window_bounds = array<i64: 256, 1024>}, {pipeline_mode = #tpu.pipeline_mode<synchronous>, transform_indices = @transform_2, window_bounds = array<i64: 1, 1024>}, {pipeline_mode = #tpu.pipeline_mode<synchronous>, transform_indices = @transform_3, window_bounds = array<i64: 1024, 512>}, {pipeline_mode = #tpu.pipeline_mode<synchronous>, transform_indices = @transform_4, window_bounds = array<i64: 1, 512>}, {pipeline_mode = #tpu.pipeline_mode<synchronous>, transform_indices = @transform_5, window_bounds = array<i64: 512, 128>}, {pipeline_mode = #tpu.pipeline_mode<synchronous>, transform_indices = @transform_6, window_bounds = array<i64: 1, 128>}, {transform_indices = @transform_7, window_bounds = array<i64: 2, 128>}]} {
    %c0 = arith.constant 0 : index
    %c0_0 = arith.constant 0 : index
    %0 = vector.load %arg1[%c0, %c0_0] : memref<2x256xf32, #tpu.memory_space<vmem>>, vector<2x256xf32>
    %c0_1 = arith.constant 0 : index
    %c0_2 = arith.constant 0 : index
    %1 = vector.load %arg2[%c0_1, %c0_2] : memref<256x1024xf32, #tpu.memory_space<vmem>>, vector<256x1024xf32>
    %cst = arith.constant dense<0.000000e+00> : vector<2x1024xf32>
    %2 = tpu.matmul %0, %1, %cst {dimension_numbers = #tpu.dot_dimension_numbers<[1], [0], [0], [1], [0, 0, 1, 1], [], []>} : vector<2x256xf32>, vector<256x1024xf32>, vector<2x1024xf32> -> vector<2x1024xf32>
    %c0_3 = arith.constant 0 : index
    %c0_4 = arith.constant 0 : index
    %3 = vector.load %arg3[%c0_3, %c0_4] : memref<1x1024xf32, #tpu.memory_space<vmem>>, vector<1x1024xf32>
    %4 = vector.broadcast %3 : vector<1x1024xf32> to vector<2x1024xf32>
    %5 = arith.addf %2, %4 : vector<2x1024xf32>
    %cst_5 = arith.constant 0.000000e+00 : f32
    %6 = vector.broadcast %cst_5 : f32 to vector<2x1024xf32>
    %7 = arith.maximumf %5, %6 : vector<2x1024xf32>
    %c0_6 = arith.constant 0 : index
    %c0_7 = arith.constant 0 : index
    %8 = vector.load %arg4[%c0_6, %c0_7] : memref<1024x512xf32, #tpu.memory_space<vmem>>, vector<1024x512xf32>
    %cst_8 = arith.constant dense<0.000000e+00> : vector<2x512xf32>
    %9 = tpu.matmul %7, %8, %cst_8 {dimension_numbers = #tpu.dot_dimension_numbers<[1], [0], [0], [1], [0, 0, 1, 1], [], []>} : vector<2x1024xf32>, vector<1024x512xf32>, vector<2x512xf32> -> vector<2x512xf32>
    %c0_9 = arith.constant 0 : index
    %c0_10 = arith.constant 0 : index
    %10 = vector.load %arg5[%c0_9, %c0_10] : memref<1x512xf32, #tpu.memory_space<vmem>>, vector<1x512xf32>
    %11 = vector.broadcast %10 : vector<1x512xf32> to vector<2x512xf32>
    %12 = arith.addf %9, %11 : vector<2x512xf32>
    %cst_11 = arith.constant 0.000000e+00 : f32
    %13 = vector.broadcast %cst_11 : f32 to vector<2x512xf32>
    %14 = arith.maximumf %12, %13 : vector<2x512xf32>
    %c0_12 = arith.constant 0 : index
    %c0_13 = arith.constant 0 : index
    %15 = vector.load %arg6[%c0_12, %c0_13] : memref<512x128xf32, #tpu.memory_space<vmem>>, vector<512x128xf32>
    %cst_14 = arith.constant dense<0.000000e+00> : vector<2x128xf32>
    %16 = tpu.matmul %14, %15, %cst_14 {dimension_numbers = #tpu.dot_dimension_numbers<[1], [0], [0], [1], [0, 0, 1, 1], [], []>} : vector<2x512xf32>, vector<512x128xf32>, vector<2x128xf32> -> vector<2x128xf32>
    %c0_15 = arith.constant 0 : index
    %c0_16 = arith.constant 0 : index
    %17 = vector.load %arg7[%c0_15, %c0_16] : memref<1x128xf32, #tpu.memory_space<vmem>>, vector<1x128xf32>
    %18 = vector.broadcast %17 : vector<1x128xf32> to vector<2x128xf32>
    %19 = arith.addf %16, %18 : vector<2x128xf32>
    %c0_17 = arith.constant 0 : index
    %c0_18 = arith.constant 0 : index
    %20 = vector.load %arg8[%c0_17, %c0_18] : memref<2x128xf32, #tpu.memory_space<vmem>>, vector<2x128xf32>
    tpu.vector_store %arg8[%c0_17, %c0_18], %19 {strides = array<i32>} : memref<2x128xf32, #tpu.memory_space<vmem>>, vector<2x128xf32>,
    return
  }
  func.func @transform_0(%arg0: i32) -> (i32, i32) {
    %c0_i32 = arith.constant 0 : i32
    %c0_i32_0 = arith.constant 0 : i32
    return %arg0, %c0_i32 : i32, i32
  }
  func.func @transform_1(%arg0: i32) -> (i32, i32) {
    %c0_i32 = arith.constant 0 : i32
    %c0_i32_0 = arith.constant 0 : i32
    %c0_i32_1 = arith.constant 0 : i32
    return %c0_i32, %c0_i32_0 : i32, i32
  }
  func.func @transform_2(%arg0: i32) -> (i32, i32) {
    %c0_i32 = arith.constant 0 : i32
    %c0_i32_0 = arith.constant 0 : i32
    %c0_i32_1 = arith.constant 0 : i32
    return %c0_i32, %c0_i32_0 : i32, i32
  }
  func.func @transform_3(%arg0: i32) -> (i32, i32) {
    %c0_i32 = arith.constant 0 : i32
    %c0_i32_0 = arith.constant 0 : i32
    %c0_i32_1 = arith.constant 0 : i32
    return %c0_i32, %c0_i32_0 : i32, i32
  }
  func.func @transform_4(%arg0: i32) -> (i32, i32) {
    %c0_i32 = arith.constant 0 : i32
    %c0_i32_0 = arith.constant 0 : i32
    %c0_i32_1 = arith.constant 0 : i32
    return %c0_i32, %c0_i32_0 : i32, i32
  }
  func.func @transform_5(%arg0: i32) -> (i32, i32) {
    %c0_i32 = arith.constant 0 : i32
    %c0_i32_0 = arith.constant 0 : i32
    %c0_i32_1 = arith.constant 0 : i32
    return %c0_i32, %c0_i32_0 : i32, i32
  }
  func.func @transform_6(%arg0: i32) -> (i32, i32) {
    %c0_i32 = arith.constant 0 : i32
    %c0_i32_0 = arith.constant 0 : i32
    %c0_i32_1 = arith.constant 0 : i32
    return %c0_i32, %c0_i32_0 : i32, i32
  }
  func.func @transform_7(%arg0: i32) -> (i32, i32) {
    %c0_i32 = arith.constant 0 : i32
    %c0_i32_0 = arith.constant 0 : i32
    return %arg0, %c0_i32 : i32, i32
  }
}

</mosaic_0001>

<llo_original>
// kernel: content_encoder_forward.1
$region0: #{content_encoder_forward.1}
  #allocation0 [shape = 'u32[]', space=smem, size = 0x4, offset = 0x4, fixed_abs, tag = 'smem constant byte address 0x4 - core index']
  #allocation1 [shape = 'u32[72,128]{1,0:T(1,128)}', space=vmem, size = 0x9000, scoped, tag = 'internal scratch']
  %s0 = inlined_call_operand.vmem [shape: f32[2,256], index: 0, kind: input, shape index: {}]
  %s1 = inlined_call_operand.vmem [shape: f32[256,1024], index: 1, kind: input, shape index: {}]
  %s2 = inlined_call_operand.vmem [shape: f32[1,1024], index: 2, kind: input, shape index: {}]
  %s3 = inlined_call_operand.vmem [shape: f32[1024,512], index: 3, kind: input, shape index: {}]
  %s4 = inlined_call_operand.vmem [shape: f32[1,512], index: 4, kind: input, shape index: {}]
  %s5 = inlined_call_operand.vmem [shape: f32[512,128], index: 5, kind: input, shape index: {}]
  %s6 = inlined_call_operand.vmem [shape: f32[1,128], index: 6, kind: input, shape index: {}]
  %s7 = inlined_call_operand.vmem [shape: f32[2,128], index: 7, kind: output, shape index: {}]
  %s8 = sld [smem:[#allocation0]]
  $region38: #{content_encoder_forward.1} parent=0
    _
  %s10 = ssub.s32 1, %s8
  %s11 = scalar_select 0, %s10, %s8
  // Predicated region
  $region2: #{content_encoder_forward.1} parent=0 // pred_check
    _
  $region3: #{content_encoder_forward.1} parent=0 // pred_check_branch
    %13 = sbr.rel (0) target = $region5
  $region4: #{content_encoder_forward.1} parent=0 // pred_region
    _
  $region5: #{content_encoder_forward.1} parent=0 // pred_fallthru
    _
  // Predicated region
  $region6: #{content_encoder_forward.1} parent=0 // pred_check
    _
  $region7: #{content_encoder_forward.1} parent=0 // pred_check_branch
    %15 = sbr.rel (0) target = $region9
  $region8: #{content_encoder_forward.1} parent=0 // pred_region
    _
  $region9: #{content_encoder_forward.1} parent=0 // pred_fallthru
    _
  // Predicated region
  $region10: #{content_encoder_forward.1} parent=0 // pred_check
    _
  $region11: #{content_encoder_forward.1} parent=0 // pred_check_branch
    %17 = sbr.rel (0) target = $region13
  $region12: #{content_encoder_forward.1} parent=0 // pred_region
    _
  $region13: #{content_encoder_forward.1} parent=0 // pred_fallthru
    _
  // Predicated region
  $region14: #{content_encoder_forward.1} parent=0 // pred_check
    _
  $region15: #{content_encoder_forward.1} parent=0 // pred_check_branch
    %19 = sbr.rel (0) target = $region17
  $region16: #{content_encoder_forward.1} parent=0 // pred_region
    _
  $region17: #{content_encoder_forward.1} parent=0 // pred_fallthru
    _
  // Predicated region
  $region18: #{content_encoder_forward.1} parent=0 // pred_check
    _
  $region19: #{content_encoder_forward.1} parent=0 // pred_check_branch
    %21 = sbr.rel (0) target = $region21
  $region20: #{content_encoder_forward.1} parent=0 // pred_region
    _
  $region21: #{content_encoder_forward.1} parent=0 // pred_fallthru
    _
  // Predicated region
  $region22: #{content_encoder_forward.1} parent=0 // pred_check
    _
  $region23: #{content_encoder_forward.1} parent=0 // pred_check_branch
    %23 = sbr.rel (0) target = $region25
  $region24: #{content_encoder_forward.1} parent=0 // pred_region
    _
  $region25: #{content_encoder_forward.1} parent=0 // pred_fallthru
    _
  // Predicated region
  $region26: #{content_encoder_forward.1} parent=0 // pred_check
    _
  $region27: #{content_encoder_forward.1} parent=0 // pred_check_branch
    %25 = sbr.rel (0) target = $region29
  $region28: #{content_encoder_forward.1} parent=0 // pred_region
    _
  $region29: #{content_encoder_forward.1} parent=0 // pred_fallthru
    _
  %v26 = vld [vmem:[%s0] sm:$0xf]
  %v27 = vld [vmem:[%s1] sm:$0xff]
  %v28 = vld [vmem:[%s1 + $0x8] sm:$0xff]
  %v29 = vld [vmem:[%s1 + $0x10] sm:$0xff]
  %v30 = vld [vmem:[%s1 + $0x18] sm:$0xff]
  %v31 = vld [vmem:[%s1 + $0x20] sm:$0xff]
  %v32 = vld [vmem:[%s1 + $0x28] sm:$0xff]
  %v33 = vld [vmem:[%s1 + $0x30] sm:$0xff]
  %v34 = vld [vmem:[%s1 + $0x38] sm:$0xff]
  %v35 = vld [vmem:[%s1 + $0x40] sm:$0xff]
  %v36 = vld [vmem:[%s1 + $0x48] sm:$0xff]
  %v37 = vld [vmem:[%s1 + $0x50] sm:$0xff]
  %v38 = vld [vmem:[%s1 + $0x58] sm:$0xff]
  %v39 = vld [vmem:[%s1 + $0x60] sm:$0xff]
  %v40 = vld [vmem:[%s1 + $0x68] sm:$0xff]
  %v41 = vld [vmem:[%s1 + $0x70] sm:$0xff]
  %v42 = vld [vmem:[%s1 + $0x78] sm:$0xff]
  %v43 = vld [vmem:[%s1 + $0x80] sm:$0xff]
  %v44 = vld [vmem:[%s1 + $0x88] sm:$0xff]
  %v45 = vld [vmem:[%s1 + $0x90] sm:$0xff]
  %v46 = vld [vmem:[%s1 + $0x98] sm:$0xff]
  %v47 = vld [vmem:[%s1 + $0xa0] sm:$0xff]
  %v48 = vld [vmem:[%s1 + $0xa8] sm:$0xff]
  %v49 = vld [vmem:[%s1 + $0xb0] sm:$0xff]
  %v50 = vld [vmem:[%s1 + $0xb8] sm:$0xff]
  %v51 = vld [vmem:[%s1 + $0xc0] sm:$0xff]
  %v52 = vld [vmem:[%s1 + $0xc8] sm:$0xff]
  %v53 = vld [vmem:[%s1 + $0xd0] sm:$0xff]
  %v54 = vld [vmem:[%s1 + $0xd8] sm:$0xff]
  %v55 = vld [vmem:[%s1 + $0xe0] sm:$0xff]
  %v56 = vld [vmem:[%s1 + $0xe8] sm:$0xff]
  %v57 = vld [vmem:[%s1 + $0xf0] sm:$0xff]
  %v58 = vld [vmem:[%s1 + $0xf8] sm:$0xff]
  %v59 = vld [vmem:[%s1 + $0x100] sm:$0xff]
  %v60 = vld [vmem:[%s1 + $0x108] sm:$0xff]
  %v61 = vld [vmem:[%s1 + $0x110] sm:$0xff]
  %v62 = vld [vmem:[%s1 + $0x118] sm:$0xff]
  %v63 = vld [vmem:[%s1 + $0x120] sm:$0xff]
  %v64 = vld [vmem:[%s1 + $0x128] sm:$0xff]
  %v65 = vld [vmem:[%s1 + $0x130] sm:$0xff]
  %v66 = vld [vmem:[%s1 + $0x138] sm:$0xff]
  %v67 = vld [vmem:[%s1 + $0x140] sm:$0xff]
  %v68 = vld [vmem:[%s1 + $0x148] sm:$0xff]
  %v69 = vld [vmem:[%s1 + $0x150] sm:$0xff]
  %v70 = vld [vmem:[%s1 + $0x158] sm:$0xff]
  %v71 = vld [vmem:[%s1 + $0x160] sm:$0xff]
  %v72 = vld [vmem:[%s1 + $0x168] sm:$0xff]
  %v73 = vld [vmem:[%s1 + $0x170] sm:$0xff]
  %v74 = vld [vmem:[%s1 + $0x178] sm:$0xff]
  %v75 = vld [vmem:[%s1 + $0x180] sm:$0xff]
  %v76 = vld [vmem:[%s1 + $0x188] sm:$0xff]
  %v77 = vld [vmem:[%s1 + $0x190] sm:$0xff]
  %v78 = vld [vmem:[%s1 + $0x198] sm:$0xff]
  %v79 = vld [vmem:[%s1 + $0x1a0] sm:$0xff]
  %v80 = vld [vmem:[%s1 + $0x1a8] sm:$0xff]
  %v81 = vld [vmem:[%s1 + $0x1b0] sm:$0xff]
  %v82 = vld [vmem:[%s1 + $0x1b8] sm:$0xff]
  %v83 = vld [vmem:[%s1 + $0x1c0] sm:$0xff]
  %v84 = vld [vmem:[%s1 + $0x1c8] sm:$0xff]
  %v85 = vld [vmem:[%s1 + $0x1d0] sm:$0xff]
  %v86 = vld [vmem:[%s1 + $0x1d8] sm:$0xff]
  %v87 = vld [vmem:[%s1 + $0x1e0] sm:$0xff]
  %v88 = vld [vmem:[%s1 + $0x1e8] sm:$0xff]
  %v89 = vld [vmem:[%s1 + $0x1f0] sm:$0xff]
  %v90 = vld [vmem:[%s1 + $0x1f8] sm:$0xff]
  %v91 = vld [vmem:[%s1 + $0x200] sm:$0xff]
  %v92 = vld [vmem:[%s1 + $0x208] sm:$0xff]
  %v93 = vld [vmem:[%s1 + $0x210] sm:$0xff]
  %v94 = vld [vmem:[%s1 + $0x218] sm:$0xff]
  %v95 = vld [vmem:[%s1 + $0x220] sm:$0xff]
  %v96 = vld [vmem:[%s1 + $0x228] sm:$0xff]
  %v97 = vld [vmem:[%s1 + $0x230] sm:$0xff]
  %v98 = vld [vmem:[%s1 + $0x238] sm:$0xff]
  %v99 = vld [vmem:[%s1 + $0x240] sm:$0xff]
  %v100 = vld [vmem:[%s1 + $0x248] sm:$0xff]
  %v101 = vld [vmem:[%s1 + $0x250] sm:$0xff]
  %v102 = vld [vmem:[%s1 + $0x258] sm:$0xff]
  %v103 = vld [vmem:[%s1 + $0x260] sm:$0xff]
  %v104 = vld [vmem:[%s1 + $0x268] sm:$0xff]
  %v105 = vld [vmem:[%s1 + $0x270] sm:$0xff]
  %v106 = vld [vmem:[%s1 + $0x278] sm:$0xff]
  %v107 = vld [vmem:[%s1 + $0x280] sm:$0xff]
  %v108 = vld [vmem:[%s1 + $0x288] sm:$0xff]
  %v109 = vld [vmem:[%s1 + $0x290] sm:$0xff]
  %v110 = vld [vmem:[%s1 + $0x298] sm:$0xff]
  %v111 = vld [vmem:[%s1 + $0x2a0] sm:$0xff]
  %v112 = vld [vmem:[%s1 + $0x2a8] sm:$0xff]
  %v113 = vld [vmem:[%s1 + $0x2b0] sm:$0xff]
  %v114 = vld [vmem:[%s1 + $0x2b8] sm:$0xff]
  %v115 = vld [vmem:[%s1 + $0x2c0] sm:$0xff]
  %v116 = vld [vmem:[%s1 + $0x2c8] sm:$0xff]
  %v117 = vld [vmem:[%s1 + $0x2d0] sm:$0xff]
  %v118 = vld [vmem:[%s1 + $0x2d8] sm:$0xff]
  %v119 = vld [vmem:[%s1 + $0x2e0] sm:$0xff]
  %v120 = vld [vmem:[%s1 + $0x2e8] sm:$0xff]
  %v121 = vld [vmem:[%s1 + $0x2f0] sm:$0xff]
  %v122 = vld [vmem:[%s1 + $0x2f8] sm:$0xff]
  %v123 = vld [vmem:[%s1 + $0x300] sm:$0xff]
  %v124 = vld [vmem:[%s1 + $0x308] sm:$0xff]
  %v125 = vld [vmem:[%s1 + $0x310] sm:$0xff]
  %v126 = vld [vmem:[%s1 + $0x318] sm:$0xff]
  %v127 = vld [vmem:[%s1 + $0x320] sm:$0xff]
  %v128 = vld [vmem:[%s1 + $0x328] sm:$0xff]
  %v129 = vld [vmem:[%s1 + $0x330] sm:$0xff]
  %v130 = vld [vmem:[%s1 + $0x338] sm:$0xff]
  %v131 = vld [vmem:[%s1 + $0x340] sm:$0xff]
  %v132 = vld [vmem:[%s1 + $0x348] sm:$0xff]
  %v133 = vld [vmem:[%s1 + $0x350] sm:$0xff]
  %v134 = vld [vmem:[%s1 + $0x358] sm:$0xff]
  %v135 = vld [vmem:[%s1 + $0x360] sm:$0xff]
  %v136 = vld [vmem:[%s1 + $0x368] sm:$0xff]
  %v137 = vld [vmem:[%s1 + $0x370] sm:$0xff]
  %v138 = vld [vmem:[%s1 + $0x378] sm:$0xff]
  %v139 = vld [vmem:[%s1 + $0x380] sm:$0xff]
  %v140 = vld [vmem:[%s1 + $0x388] sm:$0xff]
  %v141 = vld [vmem:[%s1 + $0x390] sm:$0xff]
  %v142 = vld [vmem:[%s1 + $0x398] sm:$0xff]
  %v143 = vld [vmem:[%s1 + $0x3a0] sm:$0xff]
  %v144 = vld [vmem:[%s1 + $0x3a8] sm:$0xff]
  %v145 = vld [vmem:[%s1 + $0x3b0] sm:$0xff]
  %v146 = vld [vmem:[%s1 + $0x3b8] sm:$0xff]
  %v147 = vld [vmem:[%s1 + $0x3c0] sm:$0xff]
  %v148 = vld [vmem:[%s1 + $0x3c8] sm:$0xff]
  %v149 = vld [vmem:[%s1 + $0x3d0] sm:$0xff]
  %v150 = vld [vmem:[%s1 + $0x3d8] sm:$0xff]
  %v151 = vld [vmem:[%s1 + $0x3e0] sm:$0xff]
  %v152 = vld [vmem:[%s1 + $0x3e8] sm:$0xff]
  %v153 = vld [vmem:[%s1 + $0x3f0] sm:$0xff]
  %v154 = vld [vmem:[%s1 + $0x3f8] sm:$0xff]
  %v155 = vld [vmem:[%s1 + $0x400] sm:$0xff]
  %v156 = vld [vmem:[%s1 + $0x408] sm:$0xff]
  %v157 = vld [vmem:[%s1 + $0x410] sm:$0xff]
  %v158 = vld [vmem:[%s1 + $0x418] sm:$0xff]
  %v159 = vld [vmem:[%s1 + $0x420] sm:$0xff]
  %v160 = vld [vmem:[%s1 + $0x428] sm:$0xff]
  %v161 = vld [vmem:[%s1 + $0x430] sm:$0xff]
  %v162 = vld [vmem:[%s1 + $0x438] sm:$0xff]
  %v163 = vld [vmem:[%s1 + $0x440] sm:$0xff]
  %v164 = vld [vmem:[%s1 + $0x448] sm:$0xff]
  %v165 = vld [vmem:[%s1 + $0x450] sm:$0xff]
  %v166 = vld [vmem:[%s1 + $0x458] sm:$0xff]
  %v167 = vld [vmem:[%s1 + $0x460] sm:$0xff]
  %v168 = vld [vmem:[%s1 + $0x468] sm:$0xff]
  %v169 = vld [vmem:[%s1 + $0x470] sm:$0xff]
  %v170 = vld [vmem:[%s1 + $0x478] sm:$0xff]
  %v171 = vld [vmem:[%s1 + $0x480] sm:$0xff]
  %v172 = vld [vmem:[%s1 + $0x488] sm:$0xff]
  %v173 = vld [vmem:[%s1 + $0x490] sm:$0xff]
  %v174 = vld [vmem:[%s1 + $0x498] sm:$0xff]
  %v175 = vld [vmem:[%s1 + $0x4a0] sm:$0xff]
  %v176 = vld [vmem:[%s1 + $0x4a8] sm:$0xff]
  %v177 = vld [vmem:[%s1 + $0x4b0] sm:$0xff]
  %v178 = vld [vmem:[%s1 + $0x4b8] sm:$0xff]
  %v179 = vld [vmem:[%s1 + $0x4c0] sm:$0xff]
  %v180 = vld [vmem:[%s1 + $0x4c8] sm:$0xff]
  %v181 = vld [vmem:[%s1 + $0x4d0] sm:$0xff]
  %v182 = vld [vmem:[%s1 + $0x4d8] sm:$0xff]
  %v183 = vld [vmem:[%s1 + $0x4e0] sm:$0xff]
  %v184 = vld [vmem:[%s1 + $0x4e8] sm:$0xff]
  %v185 = vld [vmem:[%s1 + $0x4f0] sm:$0xff]
  %v186 = vld [vmem:[%s1 + $0x4f8] sm:$0xff]
  %v187 = vld [vmem:[%s1 + $0x500] sm:$0xff]
  %v188 = vld [vmem:[%s1 + $0x508] sm:$0xff]
  %v189 = vld [vmem:[%s1 + $0x510] sm:$0xff]
  %v190 = vld [vmem:[%s1 + $0x518] sm:$0xff]
  %v191 = vld [vmem:[%s1 + $0x520] sm:$0xff]
  %v192 = vld [vmem:[%s1 + $0x528] sm:$0xff]
  %v193 = vld [vmem:[%s1 + $0x530] sm:$0xff]
  %v194 = vld [vmem:[%s1 + $0x538] sm:$0xff]
  %v195 = vld [vmem:[%s1 + $0x540] sm:$0xff]
  %v196 = vld [vmem:[%s1 + $0x548] sm:$0xff]
  %v197 = vld [vmem:[%s1 + $0x550] sm:$0xff]
  %v198 = vld [vmem:[%s1 + $0x558] sm:$0xff]
  %v199 = vld [vmem:[%s1 + $0x560] sm:$0xff]
  %v200 = vld [vmem:[%s1 + $0x568] sm:$0xff]
  %v201 = vld [vmem:[%s1 + $0x570] sm:$0xff]
  %v202 = vld [vmem:[%s1 + $0x578] sm:$0xff]
  %v203 = vld [vmem:[%s1 + $0x580] sm:$0xff]
  %v204 = vld [vmem:[%s1 + $0x588] sm:$0xff]
  %v205 = vld [vmem:[%s1 + $0x590] sm:$0xff]
  %v206 = vld [vmem:[%s1 + $0x598] sm:$0xff]
  %v207 = vld [vmem:[%s1 + $0x5a0] sm:$0xff]
  %v208 = vld [vmem:[%s1 + $0x5a8] sm:$0xff]
  %v209 = vld [vmem:[%s1 + $0x5b0] sm:$0xff]
  %v210 = vld [vmem:[%s1 + $0x5b8] sm:$0xff]
  %v211 = vld [vmem:[%s1 + $0x5c0] sm:$0xff]
  %v212 = vld [vmem:[%s1 + $0x5c8] sm:$0xff]
  %v213 = vld [vmem:[%s1 + $0x5d0] sm:$0xff]
  %v214 = vld [vmem:[%s1 + $0x5d8] sm:$0xff]
  %v215 = vld [vmem:[%s1 + $0x5e0] sm:$0xff]
  %v216 = vld [vmem:[%s1 + $0x5e8] sm:$0xff]
  %v217 = vld [vmem:[%s1 + $0x5f0] sm:$0xff]
  %v218 = vld [vmem:[%s1 + $0x5f8] sm:$0xff]
  %v219 = vld [vmem:[%s1 + $0x600] sm:$0xff]
  %v220 = vld [vmem:[%s1 + $0x608] sm:$0xff]
  %v221 = vld [vmem:[%s1 + $0x610] sm:$0xff]
  %v222 = vld [vmem:[%s1 + $0x618] sm:$0xff]
  %v223 = vld [vmem:[%s1 + $0x620] sm:$0xff]
  %v224 = vld [vmem:[%s1 + $0x628] sm:$0xff]
  %v225 = vld [vmem:[%s1 + $0x630] sm:$0xff]
  %v226 = vld [vmem:[%s1 + $0x638] sm:$0xff]
  %v227 = vld [vmem:[%s1 + $0x640] sm:$0xff]
  %v228 = vld [vmem:[%s1 + $0x648] sm:$0xff]
  %v229 = vld [vmem:[%s1 + $0x650] sm:$0xff]
  %v230 = vld [vmem:[%s1 + $0x658] sm:$0xff]
  %v231 = vld [vmem:[%s1 + $0x660] sm:$0xff]
  %v232 = vld [vmem:[%s1 + $0x668] sm:$0xff]
  %v233 = vld [vmem:[%s1 + $0x670] sm:$0xff]
  %v234 = vld [vmem:[%s1 + $0x678] sm:$0xff]
  %v235 = vld [vmem:[%s1 + $0x680] sm:$0xff]
  %v236 = vld [vmem:[%s1 + $0x688] sm:$0xff]
  %v237 = vld [vmem:[%s1 + $0x690] sm:$0xff]
  %v238 = vld [vmem:[%s1 + $0x698] sm:$0xff]
  %v239 = vld [vmem:[%s1 + $0x6a0] sm:$0xff]
  %v240 = vld [vmem:[%s1 + $0x6a8] sm:$0xff]
  %v241 = vld [vmem:[%s1 + $0x6b0] sm:$0xff]
  %v242 = vld [vmem:[%s1 + $0x6b8] sm:$0xff]
  %v243 = vld [vmem:[%s1 + $0x6c0] sm:$0xff]
  %v244 = vld [vmem:[%s1 + $0x6c8] sm:$0xff]
  %v245 = vld [vmem:[%s1 + $0x6d0] sm:$0xff]
  %v246 = vld [vmem:[%s1 + $0x6d8] sm:$0xff]
  %v247 = vld [vmem:[%s1 + $0x6e0] sm:$0xff]
  %v248 = vld [vmem:[%s1 + $0x6e8] sm:$0xff]
  %v249 = vld [vmem:[%s1 + $0x6f0] sm:$0xff]
  %v250 = vld [vmem:[%s1 + $0x6f8] sm:$0xff]
  %v251 = vld [vmem:[%s1 + $0x700] sm:$0xff]
  %v252 = vld [vmem:[%s1 + $0x708] sm:$0xff]
  %v253 = vld [vmem:[%s1 + $0x710] sm:$0xff]
  %v254 = vld [vmem:[%s1 + $0x718] sm:$0xff]
  %v255 = vld [vmem:[%s1 + $0x720] sm:$0xff]
  %v256 = vld [vmem:[%s1 + $0x728] sm:$0xff]
  %v257 = vld [vmem:[%s1 + $0x730] sm:$0xff]
  %v258 = vld [vmem:[%s1 + $0x738] sm:$0xff]
  %v259 = vld [vmem:[%s1 + $0x740] sm:$0xff]
  %v260 = vld [vmem:[%s1 + $0x748] sm:$0xff]
  %v261 = vld [vmem:[%s1 + $0x750] sm:$0xff]
  %v262 = vld [vmem:[%s1 + $0x758] sm:$0xff]
  %v263 = vld [vmem:[%s1 + $0x760] sm:$0xff]
  %v264 = vld [vmem:[%s1 + $0x768] sm:$0xff]
  %v265 = vld [vmem:[%s1 + $0x770] sm:$0xff]
  %v266 = vld [vmem:[%s1 + $0x778] sm:$0xff]
  %v267 = vld [vmem:[%s1 + $0x780] sm:$0xff]
  %v268 = vld [vmem:[%s1 + $0x788] sm:$0xff]
  %v269 = vld [vmem:[%s1 + $0x790] sm:$0xff]
  %v270 = vld [vmem:[%s1 + $0x798] sm:$0xff]
  %v271 = vld [vmem:[%s1 + $0x7a0] sm:$0xff]
  %v272 = vld [vmem:[%s1 + $0x7a8] sm:$0xff]
  %v273 = vld [vmem:[%s1 + $0x7b0] sm:$0xff]
  %v274 = vld [vmem:[%s1 + $0x7b8] sm:$0xff]
  %v275 = vld [vmem:[%s1 + $0x7c0] sm:$0xff]
  %v276 = vld [vmem:[%s1 + $0x7c8] sm:$0xff]
  %v277 = vld [vmem:[%s1 + $0x7d0] sm:$0xff]
  %v278 = vld [vmem:[%s1 + $0x7d8] sm:$0xff]
  %v279 = vld [vmem:[%s1 + $0x7e0] sm:$0xff]
  %v280 = vld [vmem:[%s1 + $0x7e8] sm:$0xff]
  %v281 = vld [vmem:[%s1 + $0x7f0] sm:$0xff]
  %v282 = vld [vmem:[%s1 + $0x7f8] sm:$0xff]
  %v283 = vld [vmem:[%s2] sm:$0xff]
  %v285 = vperm.slane %v283, 0
  %v286 = vperm.slane %v283, 1
  %v287 = vperm.slane %v283, 2
  %v288 = vperm.slane %v283, 3
  %v289 = vperm.slane %v283, 4
  %v290 = vperm.slane %v283, 5
  %v291 = vperm.slane %v283, 6
  %v292 = vperm.slane %v283, 7
  %302 = vst [vmem:[#allocation1] ss:$4 sm:$0xff] %v26
  %v303 = vld.sshfl [vmem:[#allocation1] sm:$0xff pattern:$0x73625140]
  %v304 = vld.sshfl [vmem:[#allocation1 + $0x8] sm:$0xff pattern:$0x73625140]
  %307 = vmatpush.msra.mxu0 %v147
  %308 = vmatpush.msra.mxu0 %v139
  %309 = vmatpush.msra.mxu0 %v131
  %310 = vmatpush.msra.mxu0 %v123
  %311 = vmatpush.msra.mxu0 %v115
  %312 = vmatpush.msra.mxu0 %v107
  %313 = vmatpush.msra.mxu0 %v99
  %314 = vmatpush.msra.mxu0 %v91
  %315 = vmatpush.msra.mxu0 %v83
  %316 = vmatpush.msra.mxu0 %v75
  %317 = vmatpush.msra.mxu0 %v67
  %318 = vmatpush.msra.mxu0 %v59
  %319 = vmatpush.msra.mxu0 %v51
  %320 = vmatpush.msra.mxu0 %v43
  %321 = vmatpush.msra.mxu0 %v35
  %322 = vmatpush.msra.mxu0 %v27
  %323 = vmatmul.f32.gmra.mxu0 %v303
  %v324 = vpop.f32.mrf.mxu0
  %v325 = vadd.f32 %v285, %v324
  %326 = vdwg.mxu0
  %327 = vmatpush.msra.mxu0 %v275
  %328 = vmatpush.msra.mxu0 %v267
  %329 = vmatpush.msra.mxu0 %v259
  %330 = vmatpush.msra.mxu0 %v251
  %331 = vmatpush.msra.mxu0 %v243
  %332 = vmatpush.msra.mxu0 %v235
  %333 = vmatpush.msra.mxu0 %v227
  %334 = vmatpush.msra.mxu0 %v219
  %335 = vmatpush.msra.mxu0 %v211
  %336 = vmatpush.msra.mxu0 %v203
  %337 = vmatpush.msra.mxu0 %v195
  %338 = vmatpush.msra.mxu0 %v187
  %339 = vmatpush.msra.mxu0 %v179
  %340 = vmatpush.msra.mxu0 %v171
  %341 = vmatpush.msra.mxu0 %v163
  %342 = vmatpush.msra.mxu0 %v155
  %343 = vmatmul.f32.gmra.mxu0 %v304
  %v344 = vpop.f32.mrf.mxu0
  %v345 = vadd.f32 %v325, %v344
  %346 = vdwg.mxu0
  %347 = vmatpush.msra.mxu0 %v148
  %348 = vmatpush.msra.mxu0 %v140
  %349 = vmatpush.msra.mxu0 %v132
  %350 = vmatpush.msra.mxu0 %v124
  %351 = vmatpush.msra.mxu0 %v116
  %352 = vmatpush.msra.mxu0 %v108
  %353 = vmatpush.msra.mxu0 %v100
  %354 = vmatpush.msra.mxu0 %v92
  %355 = vmatpush.msra.mxu0 %v84
  %356 = vmatpush.msra.mxu0 %v76
  %357 = vmatpush.msra.mxu0 %v68
  %358 = vmatpush.msra.mxu0 %v60
  %359 = vmatpush.msra.mxu0 %v52
  %360 = vmatpush.msra.mxu0 %v44
  %361 = vmatpush.msra.mxu0 %v36
  %362 = vmatpush.msra.mxu0 %v28
  %363 = vmatmul.f32.gmra.mxu0 %v303
  %v364 = vpop.f32.mrf.mxu0
  %v365 = vadd.f32 %v286, %v364
  %366 = vdwg.mxu0
  %367 = vmatpush.msra.mxu0 %v276
  %368 = vmatpush.msra.mxu0 %v268
  %369 = vmatpush.msra.mxu0 %v260
  %370 = vmatpush.msra.mxu0 %v252
  %371 = vmatpush.msra.mxu0 %v244
  %372 = vmatpush.msra.mxu0 %v236
  %373 = vmatpush.msra.mxu0 %v228
  %374 = vmatpush.msra.mxu0 %v220
  %375 = vmatpush.msra.mxu0 %v212
  %376 = vmatpush.msra.mxu0 %v204
  %377 = vmatpush.msra.mxu0 %v196
  %378 = vmatpush.msra.mxu0 %v188
  %379 = vmatpush.msra.mxu0 %v180
  %380 = vmatpush.msra.mxu0 %v172
  %381 = vmatpush.msra.mxu0 %v164
  %382 = vmatpush.msra.mxu0 %v156
  %383 = vmatmul.f32.gmra.mxu0 %v304
  %v384 = vpop.f32.mrf.mxu0
  %v385 = vadd.f32 %v365, %v384
  %386 = vdwg.mxu0
  %387 = vmatpush.msra.mxu0 %v149
  %388 = vmatpush.msra.mxu0 %v141
  %389 = vmatpush.msra.mxu0 %v133
  %390 = vmatpush.msra.mxu0 %v125
  %391 = vmatpush.msra.mxu0 %v117
  %392 = vmatpush.msra.mxu0 %v109
  %393 = vmatpush.msra.mxu0 %v101
  %394 = vmatpush.msra.mxu0 %v93
  %395 = vmatpush.msra.mxu0 %v85
  %396 = vmatpush.msra.mxu0 %v77
  %397 = vmatpush.msra.mxu0 %v69
  %398 = vmatpush.msra.mxu0 %v61
  %399 = vmatpush.msra.mxu0 %v53
  %400 = vmatpush.msra.mxu0 %v45
  %401 = vmatpush.msra.mxu0 %v37
  %402 = vmatpush.msra.mxu0 %v29
  %403 = vmatmul.f32.gmra.mxu0 %v303
  %v404 = vpop.f32.mrf.mxu0
  %v405 = vadd.f32 %v287, %v404
  %406 = vdwg.mxu0
  %407 = vmatpush.msra.mxu0 %v277
  %408 = vmatpush.msra.mxu0 %v269
  %409 = vmatpush.msra.mxu0 %v261
  %410 = vmatpush.msra.mxu0 %v253
  %411 = vmatpush.msra.mxu0 %v245
  %412 = vmatpush.msra.mxu0 %v237
  %413 = vmatpush.msra.mxu0 %v229
  %414 = vmatpush.msra.mxu0 %v221
  %415 = vmatpush.msra.mxu0 %v213
  %416 = vmatpush.msra.mxu0 %v205
  %417 = vmatpush.msra.mxu0 %v197
  %418 = vmatpush.msra.mxu0 %v189
  %419 = vmatpush.msra.mxu0 %v181
  %420 = vmatpush.msra.mxu0 %v173
  %421 = vmatpush.msra.mxu0 %v165
  %422 = vmatpush.msra.mxu0 %v157
  %423 = vmatmul.f32.gmra.mxu0 %v304
  %v424 = vpop.f32.mrf.mxu0
  %v425 = vadd.f32 %v405, %v424
  %426 = vdwg.mxu0
  %427 = vmatpush.msra.mxu0 %v150
  %428 = vmatpush.msra.mxu0 %v142
  %429 = vmatpush.msra.mxu0 %v134
  %430 = vmatpush.msra.mxu0 %v126
  %431 = vmatpush.msra.mxu0 %v118
  %432 = vmatpush.msra.mxu0 %v110
  %433 = vmatpush.msra.mxu0 %v102
  %434 = vmatpush.msra.mxu0 %v94
  %435 = vmatpush.msra.mxu0 %v86
  %436 = vmatpush.msra.mxu0 %v78
  %437 = vmatpush.msra.mxu0 %v70
  %438 = vmatpush.msra.mxu0 %v62
  %439 = vmatpush.msra.mxu0 %v54
  %440 = vmatpush.msra.mxu0 %v46
  %441 = vmatpush.msra.mxu0 %v38
  %442 = vmatpush.msra.mxu0 %v30
  %443 = vmatmul.f32.gmra.mxu0 %v303
  %v444 = vpop.f32.mrf.mxu0
  %v445 = vadd.f32 %v288, %v444
  %446 = vdwg.mxu0
  %447 = vmatpush.msra.mxu0 %v278
  %448 = vmatpush.msra.mxu0 %v270
  %449 = vmatpush.msra.mxu0 %v262
  %450 = vmatpush.msra.mxu0 %v254
  %451 = vmatpush.msra.mxu0 %v246
  %452 = vmatpush.msra.mxu0 %v238
  %453 = vmatpush.msra.mxu0 %v230
  %454 = vmatpush.msra.mxu0 %v222
  %455 = vmatpush.msra.mxu0 %v214
  %456 = vmatpush.msra.mxu0 %v206
  %457 = vmatpush.msra.mxu0 %v198
  %458 = vmatpush.msra.mxu0 %v190
  %459 = vmatpush.msra.mxu0 %v182
  %460 = vmatpush.msra.mxu0 %v174
  %461 = vmatpush.msra.mxu0 %v166
  %462 = vmatpush.msra.mxu0 %v158
  %463 = vmatmul.f32.gmra.mxu0 %v304
  %v464 = vpop.f32.mrf.mxu0
  %v465 = vadd.f32 %v445, %v464
  %466 = vdwg.mxu0
  %467 = vmatpush.msra.mxu0 %v151
  %468 = vmatpush.msra.mxu0 %v143
  %469 = vmatpush.msra.mxu0 %v135
  %470 = vmatpush.msra.mxu0 %v127
  %471 = vmatpush.msra.mxu0 %v119
  %472 = vmatpush.msra.mxu0 %v111
  %473 = vmatpush.msra.mxu0 %v103
  %474 = vmatpush.msra.mxu0 %v95
  %475 = vmatpush.msra.mxu0 %v87
  %476 = vmatpush.msra.mxu0 %v79
  %477 = vmatpush.msra.mxu0 %v71
  %478 = vmatpush.msra.mxu0 %v63
  %479 = vmatpush.msra.mxu0 %v55
  %480 = vmatpush.msra.mxu0 %v47
  %481 = vmatpush.msra.mxu0 %v39
  %482 = vmatpush.msra.mxu0 %v31
  %483 = vmatmul.f32.gmra.mxu0 %v303
  %v484 = vpop.f32.mrf.mxu0
  %v485 = vadd.f32 %v289, %v484
  %486 = vdwg.mxu0
  %487 = vmatpush.msra.mxu0 %v279
  %488 = vmatpush.msra.mxu0 %v271
  %489 = vmatpush.msra.mxu0 %v263
  %490 = vmatpush.msra.mxu0 %v255
  %491 = vmatpush.msra.mxu0 %v247
  %492 = vmatpush.msra.mxu0 %v239
  %493 = vmatpush.msra.mxu0 %v231
  %494 = vmatpush.msra.mxu0 %v223
  %495 = vmatpush.msra.mxu0 %v215
  %496 = vmatpush.msra.mxu0 %v207
  %497 = vmatpush.msra.mxu0 %v199
  %498 = vmatpush.msra.mxu0 %v191
  %499 = vmatpush.msra.mxu0 %v183
  %500 = vmatpush.msra.mxu0 %v175
  %501 = vmatpush.msra.mxu0 %v167
  %502 = vmatpush.msra.mxu0 %v159
  %503 = vmatmul.f32.gmra.mxu0 %v304
  %v504 = vpop.f32.mrf.mxu0
  %v505 = vadd.f32 %v485, %v504
  %506 = vdwg.mxu0
  %507 = vmatpush.msra.mxu0 %v152
  %508 = vmatpush.msra.mxu0 %v144
  %509 = vmatpush.msra.mxu0 %v136
  %510 = vmatpush.msra.mxu0 %v128
  %511 = vmatpush.msra.mxu0 %v120
  %512 = vmatpush.msra.mxu0 %v112
  %513 = vmatpush.msra.mxu0 %v104
  %514 = vmatpush.msra.mxu0 %v96
  %515 = vmatpush.msra.mxu0 %v88
  %516 = vmatpush.msra.mxu0 %v80
  %517 = vmatpush.msra.mxu0 %v72
  %518 = vmatpush.msra.mxu0 %v64
  %519 = vmatpush.msra.mxu0 %v56
  %520 = vmatpush.msra.mxu0 %v48
  %521 = vmatpush.msra.mxu0 %v40
  %522 = vmatpush.msra.mxu0 %v32
  %523 = vmatmul.f32.gmra.mxu0 %v303
  %v524 = vpop.f32.mrf.mxu0
  %v525 = vadd.f32 %v290, %v524
  %526 = vdwg.mxu0
  %527 = vmatpush.msra.mxu0 %v280
  %528 = vmatpush.msra.mxu0 %v272
  %529 = vmatpush.msra.mxu0 %v264
  %530 = vmatpush.msra.mxu0 %v256
  %531 = vmatpush.msra.mxu0 %v248
  %532 = vmatpush.msra.mxu0 %v240
  %533 = vmatpush.msra.mxu0 %v232
  %534 = vmatpush.msra.mxu0 %v224
  %535 = vmatpush.msra.mxu0 %v216
  %536 = vmatpush.msra.mxu0 %v208
  %537 = vmatpush.msra.mxu0 %v200
  %538 = vmatpush.msra.mxu0 %v192
  %539 = vmatpush.msra.mxu0 %v184
  %540 = vmatpush.msra.mxu0 %v176
  %541 = vmatpush.msra.mxu0 %v168
  %542 = vmatpush.msra.mxu0 %v160
  %543 = vmatmul.f32.gmra.mxu0 %v304
  %v544 = vpop.f32.mrf.mxu0
  %v545 = vadd.f32 %v525, %v544
  %546 = vdwg.mxu0
  %547 = vmatpush.msra.mxu0 %v153
  %548 = vmatpush.msra.mxu0 %v145
  %549 = vmatpush.msra.mxu0 %v137
  %550 = vmatpush.msra.mxu0 %v129
  %551 = vmatpush.msra.mxu0 %v121
  %552 = vmatpush.msra.mxu0 %v113
  %553 = vmatpush.msra.mxu0 %v105
  %554 = vmatpush.msra.mxu0 %v97
  %555 = vmatpush.msra.mxu0 %v89
  %556 = vmatpush.msra.mxu0 %v81
  %557 = vmatpush.msra.mxu0 %v73
  %558 = vmatpush.msra.mxu0 %v65
  %559 = vmatpush.msra.mxu0 %v57
  %560 = vmatpush.msra.mxu0 %v49
  %561 = vmatpush.msra.mxu0 %v41
  %562 = vmatpush.msra.mxu0 %v33
  %563 = vmatmul.f32.gmra.mxu0 %v303
  %v564 = vpop.f32.mrf.mxu0
  %v565 = vadd.f32 %v291, %v564
  %566 = vdwg.mxu0
  %567 = vmatpush.msra.mxu0 %v281
  %568 = vmatpush.msra.mxu0 %v273
  %569 = vmatpush.msra.mxu0 %v265
  %570 = vmatpush.msra.mxu0 %v257
  %571 = vmatpush.msra.mxu0 %v249
  %572 = vmatpush.msra.mxu0 %v241
  %573 = vmatpush.msra.mxu0 %v233
  %574 = vmatpush.msra.mxu0 %v225
  %575 = vmatpush.msra.mxu0 %v217
  %576 = vmatpush.msra.mxu0 %v209
  %577 = vmatpush.msra.mxu0 %v201
  %578 = vmatpush.msra.mxu0 %v193
  %579 = vmatpush.msra.mxu0 %v185
  %580 = vmatpush.msra.mxu0 %v177
  %581 = vmatpush.msra.mxu0 %v169
  %582 = vmatpush.msra.mxu0 %v161
  %583 = vmatmul.f32.gmra.mxu0 %v304
  %v584 = vpop.f32.mrf.mxu0
  %v585 = vadd.f32 %v565, %v584
  %586 = vdwg.mxu0
  %587 = vmatpush.msra.mxu0 %v154
  %588 = vmatpush.msra.mxu0 %v146
  %589 = vmatpush.msra.mxu0 %v138
  %590 = vmatpush.msra.mxu0 %v130
  %591 = vmatpush.msra.mxu0 %v122
  %592 = vmatpush.msra.mxu0 %v114
  %593 = vmatpush.msra.mxu0 %v106
  %594 = vmatpush.msra.mxu0 %v98
  %595 = vmatpush.msra.mxu0 %v90
  %596 = vmatpush.msra.mxu0 %v82
  %597 = vmatpush.msra.mxu0 %v74
  %598 = vmatpush.msra.mxu0 %v66
  %599 = vmatpush.msra.mxu0 %v58
  %600 = vmatpush.msra.mxu0 %v50
  %601 = vmatpush.msra.mxu0 %v42
  %602 = vmatpush.msra.mxu0 %v34
  %603 = vmatmul.f32.gmra.mxu0 %v303
  %v604 = vpop.f32.mrf.mxu0
  %v605 = vadd.f32 %v292, %v604
  %606 = vdwg.mxu0
  %607 = vmatpush.msra.mxu0 %v282
  %608 = vmatpush.msra.mxu0 %v274
  %609 = vmatpush.msra.mxu0 %v266
  %610 = vmatpush.msra.mxu0 %v258
  %611 = vmatpush.msra.mxu0 %v250
  %612 = vmatpush.msra.mxu0 %v242
  %613 = vmatpush.msra.mxu0 %v234
  %614 = vmatpush.msra.mxu0 %v226
  %615 = vmatpush.msra.mxu0 %v218
  %616 = vmatpush.msra.mxu0 %v210
  %617 = vmatpush.msra.mxu0 %v202
  %618 = vmatpush.msra.mxu0 %v194
  %619 = vmatpush.msra.mxu0 %v186
  %620 = vmatpush.msra.mxu0 %v178
  %621 = vmatpush.msra.mxu0 %v170
  %622 = vmatpush.msra.mxu0 %v162
  %623 = vmatmul.f32.gmra.mxu0 %v304
  %v624 = vpop.f32.mrf.mxu0
  %v625 = vadd.f32 %v605, %v624
  %626 = vdwg.mxu0
  %v627 = vmax.f32 %v345, 0.0
  %v628 = vmax.f32 %v385, 0.0
  %v629 = vmax.f32 %v425, 0.0
  %v630 = vmax.f32 %v465, 0.0
  %v631 = vmax.f32 %v505, 0.0
  %v632 = vmax.f32 %v545, 0.0
  %v633 = vmax.f32 %v585, 0.0
  %v634 = vmax.f32 %v625, 0.0
  %v635 = vld [vmem:[%s3] sm:$0xff]
  %v636 = vld [vmem:[%s3 + $0x8] sm:$0xff]
  %v637 = vld [vmem:[%s3 + $0x10] sm:$0xff]
  %v638 = vld [vmem:[%s3 + $0x18] sm:$0xff]
  %v639 = vld [vmem:[%s3 + $0x20] sm:$0xff]
  %v640 = vld [vmem:[%s3 + $0x28] sm:$0xff]
  %v641 = vld [vmem:[%s3 + $0x30] sm:$0xff]
  %v642 = vld [vmem:[%s3 + $0x38] sm:$0xff]
  %v643 = vld [vmem:[%s3 + $0x40] sm:$0xff]
  %v644 = vld [vmem:[%s3 + $0x48] sm:$0xff]
  %v645 = vld [vmem:[%s3 + $0x50] sm:$0xff]
  %v646 = vld [vmem:[%s3 + $0x58] sm:$0xff]
  %v647 = vld [vmem:[%s3 + $0x60] sm:$0xff]
  %v648 = vld [vmem:[%s3 + $0x68] sm:$0xff]
  %v649 = vld [vmem:[%s3 + $0x70] sm:$0xff]
  %v650 = vld [vmem:[%s3 + $0x78] sm:$0xff]
  %v651 = vld [vmem:[%s3 + $0x80] sm:$0xff]
  %v652 = vld [vmem:[%s3 + $0x88] sm:$0xff]
  %v653 = vld [vmem:[%s3 + $0x90] sm:$0xff]
  %v654 = vld [vmem:[%s3 + $0x98] sm:$0xff]
  %v655 = vld [vmem:[%s3 + $0xa0] sm:$0xff]
  %v656 = vld [vmem:[%s3 + $0xa8] sm:$0xff]
  %v657 = vld [vmem:[%s3 + $0xb0] sm:$0xff]
  %v658 = vld [vmem:[%s3 + $0xb8] sm:$0xff]
  %v659 = vld [vmem:[%s3 + $0xc0] sm:$0xff]
  %v660 = vld [vmem:[%s3 + $0xc8] sm:$0xff]
  %v661 = vld [vmem:[%s3 + $0xd0] sm:$0xff]
  %v662 = vld [vmem:[%s3 + $0xd8] sm:$0xff]
  %v663 = vld [vmem:[%s3 + $0xe0] sm:$0xff]
  %v664 = vld [vmem:[%s3 + $0xe8] sm:$0xff]
  %v665 = vld [vmem:[%s3 + $0xf0] sm:$0xff]
  %v666 = vld [vmem:[%s3 + $0xf8] sm:$0xff]
  %v667 = vld [vmem:[%s3 + $0x100] sm:$0xff]
  %v668 = vld [vmem:[%s3 + $0x108] sm:$0xff]
  %v669 = vld [vmem:[%s3 + $0x110] sm:$0xff]
  %v670 = vld [vmem:[%s3 + $0x118] sm:$0xff]
  %v671 = vld [vmem:[%s3 + $0x120] sm:$0xff]
  %v672 = vld [vmem:[%s3 + $0x128] sm:$0xff]
  %v673 = vld [vmem:[%s3 + $0x130] sm:$0xff]
  %v674 = vld [vmem:[%s3 + $0x138] sm:$0xff]
  %v675 = vld [vmem:[%s3 + $0x140] sm:$0xff]
  %v676 = vld [vmem:[%s3 + $0x148] sm:$0xff]
  %v677 = vld [vmem:[%s3 + $0x150] sm:$0xff]
  %v678 = vld [vmem:[%s3 + $0x158] sm:$0xff]
  %v679 = vld [vmem:[%s3 + $0x160] sm:$0xff]
  %v680 = vld [vmem:[%s3 + $0x168] sm:$0xff]
  %v681 = vld [vmem:[%s3 + $0x170] sm:$0xff]
  %v682 = vld [vmem:[%s3 + $0x178] sm:$0xff]
  %v683 = vld [vmem:[%s3 + $0x180] sm:$0xff]
  %v684 = vld [vmem:[%s3 + $0x188] sm:$0xff]
  %v685 = vld [vmem:[%s3 + $0x190] sm:$0xff]
  %v686 = vld [vmem:[%s3 + $0x198] sm:$0xff]
  %v687 = vld [vmem:[%s3 + $0x1a0] sm:$0xff]
  %v688 = vld [vmem:[%s3 + $0x1a8] sm:$0xff]
  %v689 = vld [vmem:[%s3 + $0x1b0] sm:$0xff]
  %v690 = vld [vmem:[%s3 + $0x1b8] sm:$0xff]
  %v691 = vld [vmem:[%s3 + $0x1c0] sm:$0xff]
  %v692 = vld [vmem:[%s3 + $0x1c8] sm:$0xff]
  %v693 = vld [vmem:[%s3 + $0x1d0] sm:$0xff]
  %v694 = vld [vmem:[%s3 + $0x1d8] sm:$0xff]
  %v695 = vld [vmem:[%s3 + $0x1e0] sm:$0xff]
  %v696 = vld [vmem:[%s3 + $0x1e8] sm:$0xff]
  %v697 = vld [vmem:[%s3 + $0x1f0] sm:$0xff]
  %v698 = vld [vmem:[%s3 + $0x1f8] sm:$0xff]
  %v699 = vld [vmem:[%s3 + $0x200] sm:$0xff]
  %v700 = vld [vmem:[%s3 + $0x208] sm:$0xff]
  %v701 = vld [vmem:[%s3 + $0x210] sm:$0xff]
  %v702 = vld [vmem:[%s3 + $0x218] sm:$0xff]
  %v703 = vld [vmem:[%s3 + $0x220] sm:$0xff]
  %v704 = vld [vmem:[%s3 + $0x228] sm:$0xff]
  %v705 = vld [vmem:[%s3 + $0x230] sm:$0xff]
  %v706 = vld [vmem:[%s3 + $0x238] sm:$0xff]
  %v707 = vld [vmem:[%s3 + $0x240] sm:$0xff]
  %v708 = vld [vmem:[%s3 + $0x248] sm:$0xff]
  %v709 = vld [vmem:[%s3 + $0x250] sm:$0xff]
  %v710 = vld [vmem:[%s3 + $0x258] sm:$0xff]
  %v711 = vld [vmem:[%s3 + $0x260] sm:$0xff]
  %v712 = vld [vmem:[%s3 + $0x268] sm:$0xff]
  %v713 = vld [vmem:[%s3 + $0x270] sm:$0xff]
  %v714 = vld [vmem:[%s3 + $0x278] sm:$0xff]
  %v715 = vld [vmem:[%s3 + $0x280] sm:$0xff]
  %v716 = vld [vmem:[%s3 + $0x288] sm:$0xff]
  %v717 = vld [vmem:[%s3 + $0x290] sm:$0xff]
  %v718 = vld [vmem:[%s3 + $0x298] sm:$0xff]
  %v719 = vld [vmem:[%s3 + $0x2a0] sm:$0xff]
  %v720 = vld [vmem:[%s3 + $0x2a8] sm:$0xff]
  %v721 = vld [vmem:[%s3 + $0x2b0] sm:$0xff]
  %v722 = vld [vmem:[%s3 + $0x2b8] sm:$0xff]
  %v723 = vld [vmem:[%s3 + $0x2c0] sm:$0xff]
  %v724 = vld [vmem:[%s3 + $0x2c8] sm:$0xff]
  %v725 = vld [vmem:[%s3 + $0x2d0] sm:$0xff]
  %v726 = vld [vmem:[%s3 + $0x2d8] sm:$0xff]
  %v727 = vld [vmem:[%s3 + $0x2e0] sm:$0xff]
  %v728 = vld [vmem:[%s3 + $0x2e8] sm:$0xff]
  %v729 = vld [vmem:[%s3 + $0x2f0] sm:$0xff]
  %v730 = vld [vmem:[%s3 + $0x2f8] sm:$0xff]
  %v731 = vld [vmem:[%s3 + $0x300] sm:$0xff]
  %v732 = vld [vmem:[%s3 + $0x308] sm:$0xff]
  %v733 = vld [vmem:[%s3 + $0x310] sm:$0xff]
  %v734 = vld [vmem:[%s3 + $0x318] sm:$0xff]
  %v735 = vld [vmem:[%s3 + $0x320] sm:$0xff]
  %v736 = vld [vmem:[%s3 + $0x328] sm:$0xff]
  %v737 = vld [vmem:[%s3 + $0x330] sm:$0xff]
  %v738 = vld [vmem:[%s3 + $0x338] sm:$0xff]
  %v739 = vld [vmem:[%s3 + $0x340] sm:$0xff]
  %v740 = vld [vmem:[%s3 + $0x348] sm:$0xff]
  %v741 = vld [vmem:[%s3 + $0x350] sm:$0xff]
  %v742 = vld [vmem:[%s3 + $0x358] sm:$0xff]
  %v743 = vld [vmem:[%s3 + $0x360] sm:$0xff]
  %v744 = vld [vmem:[%s3 + $0x368] sm:$0xff]
  %v745 = vld [vmem:[%s3 + $0x370] sm:$0xff]
  %v746 = vld [vmem:[%s3 + $0x378] sm:$0xff]
  %v747 = vld [vmem:[%s3 + $0x380] sm:$0xff]
  %v748 = vld [vmem:[%s3 + $0x388] sm:$0xff]
  %v749 = vld [vmem:[%s3 + $0x390] sm:$0xff]
  %v750 = vld [vmem:[%s3 + $0x398] sm:$0xff]
  %v751 = vld [vmem:[%s3 + $0x3a0] sm:$0xff]
  %v752 = vld [vmem:[%s3 + $0x3a8] sm:$0xff]
  %v753 = vld [vmem:[%s3 + $0x3b0] sm:$0xff]
  %v754 = vld [vmem:[%s3 + $0x3b8] sm:$0xff]
  %v755 = vld [vmem:[%s3 + $0x3c0] sm:$0xff]
  %v756 = vld [vmem:[%s3 + $0x3c8] sm:$0xff]
  %v757 = vld [vmem:[%s3 + $0x3d0] sm:$0xff]
  %v758 = vld [vmem:[%s3 + $0x3d8] sm:$0xff]
  %v759 = vld [vmem:[%s3 + $0x3e0] sm:$0xff]
  %v760 = vld [vmem:[%s3 + $0x3e8] sm:$0xff]
  %v761 = vld [vmem:[%s3 + $0x3f0] sm:$0xff]
  %v762 = vld [vmem:[%s3 + $0x3f8] sm:$0xff]
  %v763 = vld [vmem:[%s3 + $0x400] sm:$0xff]
  %v764 = vld [vmem:[%s3 + $0x408] sm:$0xff]
  %v765 = vld [vmem:[%s3 + $0x410] sm:$0xff]
  %v766 = vld [vmem:[%s3 + $0x418] sm:$0xff]
  %v767 = vld [vmem:[%s3 + $0x420] sm:$0xff]
  %v768 = vld [vmem:[%s3 + $0x428] sm:$0xff]
  %v769 = vld [vmem:[%s3 + $0x430] sm:$0xff]
  %v770 = vld [vmem:[%s3 + $0x438] sm:$0xff]
  %v771 = vld [vmem:[%s3 + $0x440] sm:$0xff]
  %v772 = vld [vmem:[%s3 + $0x448] sm:$0xff]
  %v773 = vld [vmem:[%s3 + $0x450] sm:$0xff]
  %v774 = vld [vmem:[%s3 + $0x458] sm:$0xff]
  %v775 = vld [vmem:[%s3 + $0x460] sm:$0xff]
  %v776 = vld [vmem:[%s3 + $0x468] sm:$0xff]
  %v777 = vld [vmem:[%s3 + $0x470] sm:$0xff]
  %v778 = vld [vmem:[%s3 + $0x478] sm:$0xff]
  %v779 = vld [vmem:[%s3 + $0x480] sm:$0xff]
  %v780 = vld [vmem:[%s3 + $0x488] sm:$0xff]
  %v781 = vld [vmem:[%s3 + $0x490] sm:$0xff]
  %v782 = vld [vmem:[%s3 + $0x498] sm:$0xff]
  %v783 = vld [vmem:[%s3 + $0x4a0] sm:$0xff]
  %v784 = vld [vmem:[%s3 + $0x4a8] sm:$0xff]
  %v785 = vld [vmem:[%s3 + $0x4b0] sm:$0xff]
  %v786 = vld [vmem:[%s3 + $0x4b8] sm:$0xff]
  %v787 = vld [vmem:[%s3 + $0x4c0] sm:$0xff]
  %v788 = vld [vmem:[%s3 + $0x4c8] sm:$0xff]
  %v789 = vld [vmem:[%s3 + $0x4d0] sm:$0xff]
  %v790 = vld [vmem:[%s3 + $0x4d8] sm:$0xff]
  %v791 = vld [vmem:[%s3 + $0x4e0] sm:$0xff]
  %v792 = vld [vmem:[%s3 + $0x4e8] sm:$0xff]
  %v793 = vld [vmem:[%s3 + $0x4f0] sm:$0xff]
  %v794 = vld [vmem:[%s3 + $0x4f8] sm:$0xff]
  %v795 = vld [vmem:[%s3 + $0x500] sm:$0xff]
  %v796 = vld [vmem:[%s3 + $0x508] sm:$0xff]
  %v797 = vld [vmem:[%s3 + $0x510] sm:$0xff]
  %v798 = vld [vmem:[%s3 + $0x518] sm:$0xff]
  %v799 = vld [vmem:[%s3 + $0x520] sm:$0xff]
  %v800 = vld [vmem:[%s3 + $0x528] sm:$0xff]
  %v801 = vld [vmem:[%s3 + $0x530] sm:$0xff]
  %v802 = vld [vmem:[%s3 + $0x538] sm:$0xff]
  %v803 = vld [vmem:[%s3 + $0x540] sm:$0xff]
  %v804 = vld [vmem:[%s3 + $0x548] sm:$0xff]
  %v805 = vld [vmem:[%s3 + $0x550] sm:$0xff]
  %v806 = vld [vmem:[%s3 + $0x558] sm:$0xff]
  %v807 = vld [vmem:[%s3 + $0x560] sm:$0xff]
  %v808 = vld [vmem:[%s3 + $0x568] sm:$0xff]
  %v809 = vld [vmem:[%s3 + $0x570] sm:$0xff]
  %v810 = vld [vmem:[%s3 + $0x578] sm:$0xff]
  %v811 = vld [vmem:[%s3 + $0x580] sm:$0xff]
  %v812 = vld [vmem:[%s3 + $0x588] sm:$0xff]
  %v813 = vld [vmem:[%s3 + $0x590] sm:$0xff]
  %v814 = vld [vmem:[%s3 + $0x598] sm:$0xff]
  %v815 = vld [vmem:[%s3 + $0x5a0] sm:$0xff]
  %v816 = vld [vmem:[%s3 + $0x5a8] sm:$0xff]
  %v817 = vld [vmem:[%s3 + $0x5b0] sm:$0xff]
  %v818 = vld [vmem:[%s3 + $0x5b8] sm:$0xff]
  %v819 = vld [vmem:[%s3 + $0x5c0] sm:$0xff]
  %v820 = vld [vmem:[%s3 + $0x5c8] sm:$0xff]
  %v821 = vld [vmem:[%s3 + $0x5d0] sm:$0xff]
  %v822 = vld [vmem:[%s3 + $0x5d8] sm:$0xff]
  %v823 = vld [vmem:[%s3 + $0x5e0] sm:$0xff]
  %v824 = vld [vmem:[%s3 + $0x5e8] sm:$0xff]
  %v825 = vld [vmem:[%s3 + $0x5f0] sm:$0xff]
  %v826 = vld [vmem:[%s3 + $0x5f8] sm:$0xff]
  %v827 = vld [vmem:[%s3 + $0x600] sm:$0xff]
  %v828 = vld [vmem:[%s3 + $0x608] sm:$0xff]
  %v829 = vld [vmem:[%s3 + $0x610] sm:$0xff]
  %v830 = vld [vmem:[%s3 + $0x618] sm:$0xff]
  %v831 = vld [vmem:[%s3 + $0x620] sm:$0xff]
  %v832 = vld [vmem:[%s3 + $0x628] sm:$0xff]
  %v833 = vld [vmem:[%s3 + $0x630] sm:$0xff]
  %v834 = vld [vmem:[%s3 + $0x638] sm:$0xff]
  %v835 = vld [vmem:[%s3 + $0x640] sm:$0xff]
  %v836 = vld [vmem:[%s3 + $0x648] sm:$0xff]
  %v837 = vld [vmem:[%s3 + $0x650] sm:$0xff]
  %v838 = vld [vmem:[%s3 + $0x658] sm:$0xff]
  %v839 = vld [vmem:[%s3 + $0x660] sm:$0xff]
  %v840 = vld [vmem:[%s3 + $0x668] sm:$0xff]
  %v841 = vld [vmem:[%s3 + $0x670] sm:$0xff]
  %v842 = vld [vmem:[%s3 + $0x678] sm:$0xff]
  %v843 = vld [vmem:[%s3 + $0x680] sm:$0xff]
  %v844 = vld [vmem:[%s3 + $0x688] sm:$0xff]
  %v845 = vld [vmem:[%s3 + $0x690] sm:$0xff]
  %v846 = vld [vmem:[%s3 + $0x698] sm:$0xff]
  %v847 = vld [vmem:[%s3 + $0x6a0] sm:$0xff]
  %v848 = vld [vmem:[%s3 + $0x6a8] sm:$0xff]
  %v849 = vld [vmem:[%s3 + $0x6b0] sm:$0xff]
  %v850 = vld [vmem:[%s3 + $0x6b8] sm:$0xff]
  %v851 = vld [vmem:[%s3 + $0x6c0] sm:$0xff]
  %v852 = vld [vmem:[%s3 + $0x6c8] sm:$0xff]
  %v853 = vld [vmem:[%s3 + $0x6d0] sm:$0xff]
  %v854 = vld [vmem:[%s3 + $0x6d8] sm:$0xff]
  %v855 = vld [vmem:[%s3 + $0x6e0] sm:$0xff]
  %v856 = vld [vmem:[%s3 + $0x6e8] sm:$0xff]
  %v857 = vld [vmem:[%s3 + $0x6f0] sm:$0xff]
  %v858 = vld [vmem:[%s3 + $0x6f8] sm:$0xff]
  %v859 = vld [vmem:[%s3 + $0x700] sm:$0xff]
  %v860 = vld [vmem:[%s3 + $0x708] sm:$0xff]
  %v861 = vld [vmem:[%s3 + $0x710] sm:$0xff]
  %v862 = vld [vmem:[%s3 + $0x718] sm:$0xff]
  %v863 = vld [vmem:[%s3 + $0x720] sm:$0xff]
  %v864 = vld [vmem:[%s3 + $0x728] sm:$0xff]
  %v865 = vld [vmem:[%s3 + $0x730] sm:$0xff]
  %v866 = vld [vmem:[%s3 + $0x738] sm:$0xff]
  %v867 = vld [vmem:[%s3 + $0x740] sm:$0xff]
  %v868 = vld [vmem:[%s3 + $0x748] sm:$0xff]
  %v869 = vld [vmem:[%s3 + $0x750] sm:$0xff]
  %v870 = vld [vmem:[%s3 + $0x758] sm:$0xff]
  %v871 = vld [vmem:[%s3 + $0x760] sm:$0xff]
  %v872 = vld [vmem:[%s3 + $0x768] sm:$0xff]
  %v873 = vld [vmem:[%s3 + $0x770] sm:$0xff]
  %v874 = vld [vmem:[%s3 + $0x778] sm:$0xff]
  %v875 = vld [vmem:[%s3 + $0x780] sm:$0xff]
  %v876 = vld [vmem:[%s3 + $0x788] sm:$0xff]
  %v877 = vld [vmem:[%s3 + $0x790] sm:$0xff]
  %v878 = vld [vmem:[%s3 + $0x798] sm:$0xff]
  %v879 = vld [vmem:[%s3 + $0x7a0] sm:$0xff]
  %v880 = vld [vmem:[%s3 + $0x7a8] sm:$0xff]
  %v881 = vld [vmem:[%s3 + $0x7b0] sm:$0xff]
  %v882 = vld [vmem:[%s3 + $0x7b8] sm:$0xff]
  %v883 = vld [vmem:[%s3 + $0x7c0] sm:$0xff]
  %v884 = vld [vmem:[%s3 + $0x7c8] sm:$0xff]
  %v885 = vld [vmem:[%s3 + $0x7d0] sm:$0xff]
  %v886 = vld [vmem:[%s3 + $0x7d8] sm:$0xff]
  %v887 = vld [vmem:[%s3 + $0x7e0] sm:$0xff]
  %v888 = vld [vmem:[%s3 + $0x7e8] sm:$0xff]
  %v889 = vld [vmem:[%s3 + $0x7f0] sm:$0xff]
  %v890 = vld [vmem:[%s3 + $0x7f8] sm:$0xff]
  %v891 = vld [vmem:[%s3 + $0x800] sm:$0xff]
  %v892 = vld [vmem:[%s3 + $0x808] sm:$0xff]
  %v893 = vld [vmem:[%s3 + $0x810] sm:$0xff]
  %v894 = vld [vmem:[%s3 + $0x818] sm:$0xff]
  %v895 = vld [vmem:[%s3 + $0x820] sm:$0xff]
  %v896 = vld [vmem:[%s3 + $0x828] sm:$0xff]
  %v897 = vld [vmem:[%s3 + $0x830] sm:$0xff]
  %v898 = vld [vmem:[%s3 + $0x838] sm:$0xff]
  %v899 = vld [vmem:[%s3 + $0x840] sm:$0xff]
  %v900 = vld [vmem:[%s3 + $0x848] sm:$0xff]
  %v901 = vld [vmem:[%s3 + $0x850] sm:$0xff]
  %v902 = vld [vmem:[%s3 + $0x858] sm:$0xff]
  %v903 = vld [vmem:[%s3 + $0x860] sm:$0xff]
  %v904 = vld [vmem:[%s3 + $0x868] sm:$0xff]
  %v905 = vld [vmem:[%s3 + $0x870] sm:$0xff]
  %v906 = vld [vmem:[%s3 + $0x878] sm:$0xff]
  %v907 = vld [vmem:[%s3 + $0x880] sm:$0xff]
  %v908 = vld [vmem:[%s3 + $0x888] sm:$0xff]
  %v909 = vld [vmem:[%s3 + $0x890] sm:$0xff]
  %v910 = vld [vmem:[%s3 + $0x898] sm:$0xff]
  %v911 = vld [vmem:[%s3 + $0x8a0] sm:$0xff]
  %v912 = vld [vmem:[%s3 + $0x8a8] sm:$0xff]
  %v913 = vld [vmem:[%s3 + $0x8b0] sm:$0xff]
  %v914 = vld [vmem:[%s3 + $0x8b8] sm:$0xff]
  %v915 = vld [vmem:[%s3 + $0x8c0] sm:$0xff]
  %v916 = vld [vmem:[%s3 + $0x8c8] sm:$0xff]
  %v917 = vld [vmem:[%s3 + $0x8d0] sm:$0xff]
  %v918 = vld [vmem:[%s3 + $0x8d8] sm:$0xff]
  %v919 = vld [vmem:[%s3 + $0x8e0] sm:$0xff]
  %v920 = vld [vmem:[%s3 + $0x8e8] sm:$0xff]
  %v921 = vld [vmem:[%s3 + $0x8f0] sm:$0xff]
  %v922 = vld [vmem:[%s3 + $0x8f8] sm:$0xff]
  %v923 = vld [vmem:[%s3 + $0x900] sm:$0xff]
  %v924 = vld [vmem:[%s3 + $0x908] sm:$0xff]
  %v925 = vld [vmem:[%s3 + $0x910] sm:$0xff]
  %v926 = vld [vmem:[%s3 + $0x918] sm:$0xff]
  %v927 = vld [vmem:[%s3 + $0x920] sm:$0xff]
  %v928 = vld [vmem:[%s3 + $0x928] sm:$0xff]
  %v929 = vld [vmem:[%s3 + $0x930] sm:$0xff]
  %v930 = vld [vmem:[%s3 + $0x938] sm:$0xff]
  %v931 = vld [vmem:[%s3 + $0x940] sm:$0xff]
  %v932 = vld [vmem:[%s3 + $0x948] sm:$0xff]
  %v933 = vld [vmem:[%s3 + $0x950] sm:$0xff]
  %v934 = vld [vmem:[%s3 + $0x958] sm:$0xff]
  %v935 = vld [vmem:[%s3 + $0x960] sm:$0xff]
  %v936 = vld [vmem:[%s3 + $0x968] sm:$0xff]
  %v937 = vld [vmem:[%s3 + $0x970] sm:$0xff]
  %v938 = vld [vmem:[%s3 + $0x978] sm:$0xff]
  %v939 = vld [vmem:[%s3 + $0x980] sm:$0xff]
  %v940 = vld [vmem:[%s3 + $0x988] sm:$0xff]
  %v941 = vld [vmem:[%s3 + $0x990] sm:$0xff]
  %v942 = vld [vmem:[%s3 + $0x998] sm:$0xff]
  %v943 = vld [vmem:[%s3 + $0x9a0] sm:$0xff]
  %v944 = vld [vmem:[%s3 + $0x9a8] sm:$0xff]
  %v945 = vld [vmem:[%s3 + $0x9b0] sm:$0xff]
  %v946 = vld [vmem:[%s3 + $0x9b8] sm:$0xff]
  %v947 = vld [vmem:[%s3 + $0x9c0] sm:$0xff]
  %v948 = vld [vmem:[%s3 + $0x9c8] sm:$0xff]
  %v949 = vld [vmem:[%s3 + $0x9d0] sm:$0xff]
  %v950 = vld [vmem:[%s3 + $0x9d8] sm:$0xff]
  %v951 = vld [vmem:[%s3 + $0x9e0] sm:$0xff]
  %v952 = vld [vmem:[%s3 + $0x9e8] sm:$0xff]
  %v953 = vld [vmem:[%s3 + $0x9f0] sm:$0xff]
  %v954 = vld [vmem:[%s3 + $0x9f8] sm:$0xff]
  %v955 = vld [vmem:[%s3 + $0xa00] sm:$0xff]
  %v956 = vld [vmem:[%s3 + $0xa08] sm:$0xff]
  %v957 = vld [vmem:[%s3 + $0xa10] sm:$0xff]
  %v958 = vld [vmem:[%s3 + $0xa18] sm:$0xff]
  %v959 = vld [vmem:[%s3 + $0xa20] sm:$0xff]
  %v960 = vld [vmem:[%s3 + $0xa28] sm:$0xff]
  %v961 = vld [vmem:[%s3 + $0xa30] sm:$0xff]
  %v962 = vld [vmem:[%s3 + $0xa38] sm:$0xff]
  %v963 = vld [vmem:[%s3 + $0xa40] sm:$0xff]
  %v964 = vld [vmem:[%s3 + $0xa48] sm:$0xff]
  %v965 = vld [vmem:[%s3 + $0xa50] sm:$0xff]
  %v966 = vld [vmem:[%s3 + $0xa58] sm:$0xff]
  %v967 = vld [vmem:[%s3 + $0xa60] sm:$0xff]
  %v968 = vld [vmem:[%s3 + $0xa68] sm:$0xff]
  %v969 = vld [vmem:[%s3 + $0xa70] sm:$0xff]
  %v970 = vld [vmem:[%s3 + $0xa78] sm:$0xff]
  %v971 = vld [vmem:[%s3 + $0xa80] sm:$0xff]
  %v972 = vld [vmem:[%s3 + $0xa88] sm:$0xff]
  %v973 = vld [vmem:[%s3 + $0xa90] sm:$0xff]
  %v974 = vld [vmem:[%s3 + $0xa98] sm:$0xff]
  %v975 = vld [vmem:[%s3 + $0xaa0] sm:$0xff]
  %v976 = vld [vmem:[%s3 + $0xaa8] sm:$0xff]
  %v977 = vld [vmem:[%s3 + $0xab0] sm:$0xff]
  %v978 = vld [vmem:[%s3 + $0xab8] sm:$0xff]
  %v979 = vld [vmem:[%s3 + $0xac0] sm:$0xff]
  %v980 = vld [vmem:[%s3 + $0xac8] sm:$0xff]
  %v981 = vld [vmem:[%s3 + $0xad0] sm:$0xff]
  %v982 = vld [vmem:[%s3 + $0xad8] sm:$0xff]
  %v983 = vld [vmem:[%s3 + $0xae0] sm:$0xff]
  %v984 = vld [vmem:[%s3 + $0xae8] sm:$0xff]
  %v985 = vld [vmem:[%s3 + $0xaf0] sm:$0xff]
  %v986 = vld [vmem:[%s3 + $0xaf8] sm:$0xff]
  %v987 = vld [vmem:[%s3 + $0xb00] sm:$0xff]
  %v988 = vld [vmem:[%s3 + $0xb08] sm:$0xff]
  %v989 = vld [vmem:[%s3 + $0xb10] sm:$0xff]
  %v990 = vld [vmem:[%s3 + $0xb18] sm:$0xff]
  %v991 = vld [vmem:[%s3 + $0xb20] sm:$0xff]
  %v992 = vld [vmem:[%s3 + $0xb28] sm:$0xff]
  %v993 = vld [vmem:[%s3 + $0xb30] sm:$0xff]
  %v994 = vld [vmem:[%s3 + $0xb38] sm:$0xff]
  %v995 = vld [vmem:[%s3 + $0xb40] sm:$0xff]
  %v996 = vld [vmem:[%s3 + $0xb48] sm:$0xff]
  %v997 = vld [vmem:[%s3 + $0xb50] sm:$0xff]
  %v998 = vld [vmem:[%s3 + $0xb58] sm:$0xff]
  %v999 = vld [vmem:[%s3 + $0xb60] sm:$0xff]
  %v1000 = vld [vmem:[%s3 + $0xb68] sm:$0xff]
  %v1001 = vld [vmem:[%s3 + $0xb70] sm:$0xff]
  %v1002 = vld [vmem:[%s3 + $0xb78] sm:$0xff]
  %v1003 = vld [vmem:[%s3 + $0xb80] sm:$0xff]
  %v1004 = vld [vmem:[%s3 + $0xb88] sm:$0xff]
  %v1005 = vld [vmem:[%s3 + $0xb90] sm:$0xff]
  %v1006 = vld [vmem:[%s3 + $0xb98] sm:$0xff]
  %v1007 = vld [vmem:[%s3 + $0xba0] sm:$0xff]
  %v1008 = vld [vmem:[%s3 + $0xba8] sm:$0xff]
  %v1009 = vld [vmem:[%s3 + $0xbb0] sm:$0xff]
  %v1010 = vld [vmem:[%s3 + $0xbb8] sm:$0xff]
  %v1011 = vld [vmem:[%s3 + $0xbc0] sm:$0xff]
  %v1012 = vld [vmem:[%s3 + $0xbc8] sm:$0xff]
  %v1013 = vld [vmem:[%s3 + $0xbd0] sm:$0xff]
  %v1014 = vld [vmem:[%s3 + $0xbd8] sm:$0xff]
  %v1015 = vld [vmem:[%s3 + $0xbe0] sm:$0xff]
  %v1016 = vld [vmem:[%s3 + $0xbe8] sm:$0xff]
  %v1017 = vld [vmem:[%s3 + $0xbf0] sm:$0xff]
  %v1018 = vld [vmem:[%s3 + $0xbf8] sm:$0xff]
  %v1019 = vld [vmem:[%s3 + $0xc00] sm:$0xff]
  %v1020 = vld [vmem:[%s3 + $0xc08] sm:$0xff]
  %v1021 = vld [vmem:[%s3 + $0xc10] sm:$0xff]
  %v1022 = vld [vmem:[%s3 + $0xc18] sm:$0xff]
  %v1023 = vld [vmem:[%s3 + $0xc20] sm:$0xff]
  %v1024 = vld [vmem:[%s3 + $0xc28] sm:$0xff]
  %v1025 = vld [vmem:[%s3 + $0xc30] sm:$0xff]
  %v1026 = vld [vmem:[%s3 + $0xc38] sm:$0xff]
  %v1027 = vld [vmem:[%s3 + $0xc40] sm:$0xff]
  %v1028 = vld [vmem:[%s3 + $0xc48] sm:$0xff]
  %v1029 = vld [vmem:[%s3 + $0xc50] sm:$0xff]
  %v1030 = vld [vmem:[%s3 + $0xc58] sm:$0xff]
  %v1031 = vld [vmem:[%s3 + $0xc60] sm:$0xff]
  %v1032 = vld [vmem:[%s3 + $0xc68] sm:$0xff]
  %v1033 = vld [vmem:[%s3 + $0xc70] sm:$0xff]
  %v1034 = vld [vmem:[%s3 + $0xc78] sm:$0xff]
  %v1035 = vld [vmem:[%s3 + $0xc80] sm:$0xff]
  %v1036 = vld [vmem:[%s3 + $0xc88] sm:$0xff]
  %v1037 = vld [vmem:[%s3 + $0xc90] sm:$0xff]
  %v1038 = vld [vmem:[%s3 + $0xc98] sm:$0xff]
  %v1039 = vld [vmem:[%s3 + $0xca0] sm:$0xff]
  %v1040 = vld [vmem:[%s3 + $0xca8] sm:$0xff]
  %v1041 = vld [vmem:[%s3 + $0xcb0] sm:$0xff]
  %v1042 = vld [vmem:[%s3 + $0xcb8] sm:$0xff]
  %v1043 = vld [vmem:[%s3 + $0xcc0] sm:$0xff]
  %v1044 = vld [vmem:[%s3 + $0xcc8] sm:$0xff]
  %v1045 = vld [vmem:[%s3 + $0xcd0] sm:$0xff]
  %v1046 = vld [vmem:[%s3 + $0xcd8] sm:$0xff]
  %v1047 = vld [vmem:[%s3 + $0xce0] sm:$0xff]
  %v1048 = vld [vmem:[%s3 + $0xce8] sm:$0xff]
  %v1049 = vld [vmem:[%s3 + $0xcf0] sm:$0xff]
  %v1050 = vld [vmem:[%s3 + $0xcf8] sm:$0xff]
  %v1051 = vld [vmem:[%s3 + $0xd00] sm:$0xff]
  %v1052 = vld [vmem:[%s3 + $0xd08] sm:$0xff]
  %v1053 = vld [vmem:[%s3 + $0xd10] sm:$0xff]
  %v1054 = vld [vmem:[%s3 + $0xd18] sm:$0xff]
  %v1055 = vld [vmem:[%s3 + $0xd20] sm:$0xff]
  %v1056 = vld [vmem:[%s3 + $0xd28] sm:$0xff]
  %v1057 = vld [vmem:[%s3 + $0xd30] sm:$0xff]
  %v1058 = vld [vmem:[%s3 + $0xd38] sm:$0xff]
  %v1059 = vld [vmem:[%s3 + $0xd40] sm:$0xff]
  %v1060 = vld [vmem:[%s3 + $0xd48] sm:$0xff]
  %v1061 = vld [vmem:[%s3 + $0xd50] sm:$0xff]
  %v1062 = vld [vmem:[%s3 + $0xd58] sm:$0xff]
  %v1063 = vld [vmem:[%s3 + $0xd60] sm:$0xff]
  %v1064 = vld [vmem:[%s3 + $0xd68] sm:$0xff]
  %v1065 = vld [vmem:[%s3 + $0xd70] sm:$0xff]
  %v1066 = vld [vmem:[%s3 + $0xd78] sm:$0xff]
  %v1067 = vld [vmem:[%s3 + $0xd80] sm:$0xff]
  %v1068 = vld [vmem:[%s3 + $0xd88] sm:$0xff]
  %v1069 = vld [vmem:[%s3 + $0xd90] sm:$0xff]
  %v1070 = vld [vmem:[%s3 + $0xd98] sm:$0xff]
  %v1071 = vld [vmem:[%s3 + $0xda0] sm:$0xff]
  %v1072 = vld [vmem:[%s3 + $0xda8] sm:$0xff]
  %v1073 = vld [vmem:[%s3 + $0xdb0] sm:$0xff]
  %v1074 = vld [vmem:[%s3 + $0xdb8] sm:$0xff]
  %v1075 = vld [vmem:[%s3 + $0xdc0] sm:$0xff]
  %v1076 = vld [vmem:[%s3 + $0xdc8] sm:$0xff]
  %v1077 = vld [vmem:[%s3 + $0xdd0] sm:$0xff]
  %v1078 = vld [vmem:[%s3 + $0xdd8] sm:$0xff]
  %v1079 = vld [vmem:[%s3 + $0xde0] sm:$0xff]
  %v1080 = vld [vmem:[%s3 + $0xde8] sm:$0xff]
  %v1081 = vld [vmem:[%s3 + $0xdf0] sm:$0xff]
  %v1082 = vld [vmem:[%s3 + $0xdf8] sm:$0xff]
  %v1083 = vld [vmem:[%s3 + $0xe00] sm:$0xff]
  %v1084 = vld [vmem:[%s3 + $0xe08] sm:$0xff]
  %v1085 = vld [vmem:[%s3 + $0xe10] sm:$0xff]
  %v1086 = vld [vmem:[%s3 + $0xe18] sm:$0xff]
  %v1087 = vld [vmem:[%s3 + $0xe20] sm:$0xff]
  %v1088 = vld [vmem:[%s3 + $0xe28] sm:$0xff]
  %v1089 = vld [vmem:[%s3 + $0xe30] sm:$0xff]
  %v1090 = vld [vmem:[%s3 + $0xe38] sm:$0xff]
  %v1091 = vld [vmem:[%s3 + $0xe40] sm:$0xff]
  %v1092 = vld [vmem:[%s3 + $0xe48] sm:$0xff]
  %v1093 = vld [vmem:[%s3 + $0xe50] sm:$0xff]
  %v1094 = vld [vmem:[%s3 + $0xe58] sm:$0xff]
  %v1095 = vld [vmem:[%s3 + $0xe60] sm:$0xff]
  %v1096 = vld [vmem:[%s3 + $0xe68] sm:$0xff]
  %v1097 = vld [vmem:[%s3 + $0xe70] sm:$0xff]
  %v1098 = vld [vmem:[%s3 + $0xe78] sm:$0xff]
  %v1099 = vld [vmem:[%s3 + $0xe80] sm:$0xff]
  %v1100 = vld [vmem:[%s3 + $0xe88] sm:$0xff]
  %v1101 = vld [vmem:[%s3 + $0xe90] sm:$0xff]
  %v1102 = vld [vmem:[%s3 + $0xe98] sm:$0xff]
  %v1103 = vld [vmem:[%s3 + $0xea0] sm:$0xff]
  %v1104 = vld [vmem:[%s3 + $0xea8] sm:$0xff]
  %v1105 = vld [vmem:[%s3 + $0xeb0] sm:$0xff]
  %v1106 = vld [vmem:[%s3 + $0xeb8] sm:$0xff]
  %v1107 = vld [vmem:[%s3 + $0xec0] sm:$0xff]
  %v1108 = vld [vmem:[%s3 + $0xec8] sm:$0xff]
  %v1109 = vld [vmem:[%s3 + $0xed0] sm:$0xff]
  %v1110 = vld [vmem:[%s3 + $0xed8] sm:$0xff]
  %v1111 = vld [vmem:[%s3 + $0xee0] sm:$0xff]
  %v1112 = vld [vmem:[%s3 + $0xee8] sm:$0xff]
  %v1113 = vld [vmem:[%s3 + $0xef0] sm:$0xff]
  %v1114 = vld [vmem:[%s3 + $0xef8] sm:$0xff]
  %v1115 = vld [vmem:[%s3 + $0xf00] sm:$0xff]
  %v1116 = vld [vmem:[%s3 + $0xf08] sm:$0xff]
  %v1117 = vld [vmem:[%s3 + $0xf10] sm:$0xff]
  %v1118 = vld [vmem:[%s3 + $0xf18] sm:$0xff]
  %v1119 = vld [vmem:[%s3 + $0xf20] sm:$0xff]
  %v1120 = vld [vmem:[%s3 + $0xf28] sm:$0xff]
  %v1121 = vld [vmem:[%s3 + $0xf30] sm:$0xff]
  %v1122 = vld [vmem:[%s3 + $0xf38] sm:$0xff]
  %v1123 = vld [vmem:[%s3 + $0xf40] sm:$0xff]
  %v1124 = vld [vmem:[%s3 + $0xf48] sm:$0xff]
  %v1125 = vld [vmem:[%s3 + $0xf50] sm:$0xff]
  %v1126 = vld [vmem:[%s3 + $0xf58] sm:$0xff]
  %v1127 = vld [vmem:[%s3 + $0xf60] sm:$0xff]
  %v1128 = vld [vmem:[%s3 + $0xf68] sm:$0xff]
  %v1129 = vld [vmem:[%s3 + $0xf70] sm:$0xff]
  %v1130 = vld [vmem:[%s3 + $0xf78] sm:$0xff]
  %v1131 = vld [vmem:[%s3 + $0xf80] sm:$0xff]
  %v1132 = vld [vmem:[%s3 + $0xf88] sm:$0xff]
  %v1133 = vld [vmem:[%s3 + $0xf90] sm:$0xff]
  %v1134 = vld [vmem:[%s3 + $0xf98] sm:$0xff]
  %v1135 = vld [vmem:[%s3 + $0xfa0] sm:$0xff]
  %v1136 = vld [vmem:[%s3 + $0xfa8] sm:$0xff]
  %v1137 = vld [vmem:[%s3 + $0xfb0] sm:$0xff]
  %v1138 = vld [vmem:[%s3 + $0xfb8] sm:$0xff]
  %v1139 = vld [vmem:[%s3 + $0xfc0] sm:$0xff]
  %v1140 = vld [vmem:[%s3 + $0xfc8] sm:$0xff]
  %v1141 = vld [vmem:[%s3 + $0xfd0] sm:$0xff]
  %v1142 = vld [vmem:[%s3 + $0xfd8] sm:$0xff]
  %v1143 = vld [vmem:[%s3 + $0xfe0] sm:$0xff]
  %v1144 = vld [vmem:[%s3 + $0xfe8] sm:$0xff]
  %v1145 = vld [vmem:[%s3 + $0xff0] sm:$0xff]
  %v1146 = vld [vmem:[%s3 + $0xff8] sm:$0xff]
  %v1147 = vld [vmem:[%s4] sm:$0xf]
  %v1149 = vperm.slane %v1147, 0
  %v1150 = vperm.slane %v1147, 1
  %v1151 = vperm.slane %v1147, 2
  %v1152 = vperm.slane %v1147, 3
  %1157 = vmatpush.msra.mxu0 %v695
  %1158 = vmatpush.msra.mxu0 %v691
  %1159 = vmatpush.msra.mxu0 %v687
  %1160 = vmatpush.msra.mxu0 %v683
  %1161 = vmatpush.msra.mxu0 %v679
  %1162 = vmatpush.msra.mxu0 %v675
  %1163 = vmatpush.msra.mxu0 %v671
  %1164 = vmatpush.msra.mxu0 %v667
  %1165 = vmatpush.msra.mxu0 %v663
  %1166 = vmatpush.msra.mxu0 %v659
  %1167 = vmatpush.msra.mxu0 %v655
  %1168 = vmatpush.msra.mxu0 %v651
  %1169 = vmatpush.msra.mxu0 %v647
  %1170 = vmatpush.msra.mxu0 %v643
  %1171 = vmatpush.msra.mxu0 %v639
  %1172 = vmatpush.msra.mxu0 %v635
  %1173 = vmatmul.f32.gmra.mxu0 %v627
  %v1174 = vpop.f32.mrf.mxu0
  %v1175 = vadd.f32 %v1149, %v1174
  %1176 = vdwg.mxu0
  %1177 = vmatpush.msra.mxu0 %v759
  %1178 = vmatpush.msra.mxu0 %v755
  %1179 = vmatpush.msra.mxu0 %v751
  %1180 = vmatpush.msra.mxu0 %v747
  %1181 = vmatpush.msra.mxu0 %v743
  %1182 = vmatpush.msra.mxu0 %v739
  %1183 = vmatpush.msra.mxu0 %v735
  %1184 = vmatpush.msra.mxu0 %v731
  %1185 = vmatpush.msra.mxu0 %v727
  %1186 = vmatpush.msra.mxu0 %v723
  %1187 = vmatpush.msra.mxu0 %v719
  %1188 = vmatpush.msra.mxu0 %v715
  %1189 = vmatpush.msra.mxu0 %v711
  %1190 = vmatpush.msra.mxu0 %v707
  %1191 = vmatpush.msra.mxu0 %v703
  %1192 = vmatpush.msra.mxu0 %v699
  %1193 = vmatmul.f32.gmra.mxu0 %v628
  %v1194 = vpop.f32.mrf.mxu0
  %v1195 = vadd.f32 %v1175, %v1194
  %1196 = vdwg.mxu0
  %1197 = vmatpush.msra.mxu0 %v823
  %1198 = vmatpush.msra.mxu0 %v819
  %1199 = vmatpush.msra.mxu0 %v815
  %1200 = vmatpush.msra.mxu0 %v811
  %1201 = vmatpush.msra.mxu0 %v807
  %1202 = vmatpush.msra.mxu0 %v803
  %1203 = vmatpush.msra.mxu0 %v799
  %1204 = vmatpush.msra.mxu0 %v795
  %1205 = vmatpush.msra.mxu0 %v791
  %1206 = vmatpush.msra.mxu0 %v787
  %1207 = vmatpush.msra.mxu0 %v783
  %1208 = vmatpush.msra.mxu0 %v779
  %1209 = vmatpush.msra.mxu0 %v775
  %1210 = vmatpush.msra.mxu0 %v771
  %1211 = vmatpush.msra.mxu0 %v767
  %1212 = vmatpush.msra.mxu0 %v763
  %1213 = vmatmul.f32.gmra.mxu0 %v629
  %v1214 = vpop.f32.mrf.mxu0
  %v1215 = vadd.f32 %v1195, %v1214
  %1216 = vdwg.mxu0
  %1217 = vmatpush.msra.mxu0 %v887
  %1218 = vmatpush.msra.mxu0 %v883
  %1219 = vmatpush.msra.mxu0 %v879
  %1220 = vmatpush.msra.mxu0 %v875
  %1221 = vmatpush.msra.mxu0 %v871
  %1222 = vmatpush.msra.mxu0 %v867
  %1223 = vmatpush.msra.mxu0 %v863
  %1224 = vmatpush.msra.mxu0 %v859
  %1225 = vmatpush.msra.mxu0 %v855
  %1226 = vmatpush.msra.mxu0 %v851
  %1227 = vmatpush.msra.mxu0 %v847
  %1228 = vmatpush.msra.mxu0 %v843
  %1229 = vmatpush.msra.mxu0 %v839
  %1230 = vmatpush.msra.mxu0 %v835
  %1231 = vmatpush.msra.mxu0 %v831
  %1232 = vmatpush.msra.mxu0 %v827
  %1233 = vmatmul.f32.gmra.mxu0 %v630
  %v1234 = vpop.f32.mrf.mxu0
  %v1235 = vadd.f32 %v1215, %v1234
  %1236 = vdwg.mxu0
  %1237 = vmatpush.msra.mxu0 %v951
  %1238 = vmatpush.msra.mxu0 %v947
  %1239 = vmatpush.msra.mxu0 %v943
  %1240 = vmatpush.msra.mxu0 %v939
  %1241 = vmatpush.msra.mxu0 %v935
  %1242 = vmatpush.msra.mxu0 %v931
  %1243 = vmatpush.msra.mxu0 %v927
  %1244 = vmatpush.msra.mxu0 %v923
  %1245 = vmatpush.msra.mxu0 %v919
  %1246 = vmatpush.msra.mxu0 %v915
  %1247 = vmatpush.msra.mxu0 %v911
  %1248 = vmatpush.msra.mxu0 %v907
  %1249 = vmatpush.msra.mxu0 %v903
  %1250 = vmatpush.msra.mxu0 %v899
  %1251 = vmatpush.msra.mxu0 %v895
  %1252 = vmatpush.msra.mxu0 %v891
  %1253 = vmatmul.f32.gmra.mxu0 %v631
  %v1254 = vpop.f32.mrf.mxu0
  %v1255 = vadd.f32 %v1235, %v1254
  %1256 = vdwg.mxu0
  %1257 = vmatpush.msra.mxu0 %v1015
  %1258 = vmatpush.msra.mxu0 %v1011
  %1259 = vmatpush.msra.mxu0 %v1007
  %1260 = vmatpush.msra.mxu0 %v1003
  %1261 = vmatpush.msra.mxu0 %v999
  %1262 = vmatpush.msra.mxu0 %v995
  %1263 = vmatpush.msra.mxu0 %v991
  %1264 = vmatpush.msra.mxu0 %v987
  %1265 = vmatpush.msra.mxu0 %v983
  %1266 = vmatpush.msra.mxu0 %v979
  %1267 = vmatpush.msra.mxu0 %v975
  %1268 = vmatpush.msra.mxu0 %v971
  %1269 = vmatpush.msra.mxu0 %v967
  %1270 = vmatpush.msra.mxu0 %v963
  %1271 = vmatpush.msra.mxu0 %v959
  %1272 = vmatpush.msra.mxu0 %v955
  %1273 = vmatmul.f32.gmra.mxu0 %v632
  %v1274 = vpop.f32.mrf.mxu0
  %v1275 = vadd.f32 %v1255, %v1274
  %1276 = vdwg.mxu0
  %1277 = vmatpush.msra.mxu0 %v1079
  %1278 = vmatpush.msra.mxu0 %v1075
  %1279 = vmatpush.msra.mxu0 %v1071
  %1280 = vmatpush.msra.mxu0 %v1067
  %1281 = vmatpush.msra.mxu0 %v1063
  %1282 = vmatpush.msra.mxu0 %v1059
  %1283 = vmatpush.msra.mxu0 %v1055
  %1284 = vmatpush.msra.mxu0 %v1051
  %1285 = vmatpush.msra.mxu0 %v1047
  %1286 = vmatpush.msra.mxu0 %v1043
  %1287 = vmatpush.msra.mxu0 %v1039
  %1288 = vmatpush.msra.mxu0 %v1035
  %1289 = vmatpush.msra.mxu0 %v1031
  %1290 = vmatpush.msra.mxu0 %v1027
  %1291 = vmatpush.msra.mxu0 %v1023
  %1292 = vmatpush.msra.mxu0 %v1019
  %1293 = vmatmul.f32.gmra.mxu0 %v633
  %v1294 = vpop.f32.mrf.mxu0
  %v1295 = vadd.f32 %v1275, %v1294
  %1296 = vdwg.mxu0
  %1297 = vmatpush.msra.mxu0 %v1143
  %1298 = vmatpush.msra.mxu0 %v1139
  %1299 = vmatpush.msra.mxu0 %v1135
  %1300 = vmatpush.msra.mxu0 %v1131
  %1301 = vmatpush.msra.mxu0 %v1127
  %1302 = vmatpush.msra.mxu0 %v1123
  %1303 = vmatpush.msra.mxu0 %v1119
  %1304 = vmatpush.msra.mxu0 %v1115
  %1305 = vmatpush.msra.mxu0 %v1111
  %1306 = vmatpush.msra.mxu0 %v1107
  %1307 = vmatpush.msra.mxu0 %v1103
  %1308 = vmatpush.msra.mxu0 %v1099
  %1309 = vmatpush.msra.mxu0 %v1095
  %1310 = vmatpush.msra.mxu0 %v1091
  %1311 = vmatpush.msra.mxu0 %v1087
  %1312 = vmatpush.msra.mxu0 %v1083
  %1313 = vmatmul.f32.gmra.mxu0 %v634
  %v1314 = vpop.f32.mrf.mxu0
  %v1315 = vadd.f32 %v1295, %v1314
  %1316 = vdwg.mxu0
  %1317 = vmatpush.msra.mxu0 %v696
  %1318 = vmatpush.msra.mxu0 %v692
  %1319 = vmatpush.msra.mxu0 %v688
  %1320 = vmatpush.msra.mxu0 %v684
  %1321 = vmatpush.msra.mxu0 %v680
  %1322 = vmatpush.msra.mxu0 %v676
  %1323 = vmatpush.msra.mxu0 %v672
  %1324 = vmatpush.msra.mxu0 %v668
  %1325 = vmatpush.msra.mxu0 %v664
  %1326 = vmatpush.msra.mxu0 %v660
  %1327 = vmatpush.msra.mxu0 %v656
  %1328 = vmatpush.msra.mxu0 %v652
  %1329 = vmatpush.msra.mxu0 %v648
  %1330 = vmatpush.msra.mxu0 %v644
  %1331 = vmatpush.msra.mxu0 %v640
  %1332 = vmatpush.msra.mxu0 %v636
  %1333 = vmatmul.f32.gmra.mxu0 %v627
  %v1334 = vpop.f32.mrf.mxu0
  %v1335 = vadd.f32 %v1150, %v1334
  %1336 = vdwg.mxu0
  %1337 = vmatpush.msra.mxu0 %v760
  %1338 = vmatpush.msra.mxu0 %v756
  %1339 = vmatpush.msra.mxu0 %v752
  %1340 = vmatpush.msra.mxu0 %v748
  %1341 = vmatpush.msra.mxu0 %v744
  %1342 = vmatpush.msra.mxu0 %v740
  %1343 = vmatpush.msra.mxu0 %v736
  %1344 = vmatpush.msra.mxu0 %v732
  %1345 = vmatpush.msra.mxu0 %v728
  %1346 = vmatpush.msra.mxu0 %v724
  %1347 = vmatpush.msra.mxu0 %v720
  %1348 = vmatpush.msra.mxu0 %v716
  %1349 = vmatpush.msra.mxu0 %v712
  %1350 = vmatpush.msra.mxu0 %v708
  %1351 = vmatpush.msra.mxu0 %v704
  %1352 = vmatpush.msra.mxu0 %v700
  %1353 = vmatmul.f32.gmra.mxu0 %v628
  %v1354 = vpop.f32.mrf.mxu0
  %v1355 = vadd.f32 %v1335, %v1354
  %1356 = vdwg.mxu0
  %1357 = vmatpush.msra.mxu0 %v824
  %1358 = vmatpush.msra.mxu0 %v820
  %1359 = vmatpush.msra.mxu0 %v816
  %1360 = vmatpush.msra.mxu0 %v812
  %1361 = vmatpush.msra.mxu0 %v808
  %1362 = vmatpush.msra.mxu0 %v804
  %1363 = vmatpush.msra.mxu0 %v800
  %1364 = vmatpush.msra.mxu0 %v796
  %1365 = vmatpush.msra.mxu0 %v792
  %1366 = vmatpush.msra.mxu0 %v788
  %1367 = vmatpush.msra.mxu0 %v784
  %1368 = vmatpush.msra.mxu0 %v780
  %1369 = vmatpush.msra.mxu0 %v776
  %1370 = vmatpush.msra.mxu0 %v772
  %1371 = vmatpush.msra.mxu0 %v768
  %1372 = vmatpush.msra.mxu0 %v764
  %1373 = vmatmul.f32.gmra.mxu0 %v629
  %v1374 = vpop.f32.mrf.mxu0
  %v1375 = vadd.f32 %v1355, %v1374
  %1376 = vdwg.mxu0
  %1377 = vmatpush.msra.mxu0 %v888
  %1378 = vmatpush.msra.mxu0 %v884
  %1379 = vmatpush.msra.mxu0 %v880
  %1380 = vmatpush.msra.mxu0 %v876
  %1381 = vmatpush.msra.mxu0 %v872
  %1382 = vmatpush.msra.mxu0 %v868
  %1383 = vmatpush.msra.mxu0 %v864
  %1384 = vmatpush.msra.mxu0 %v860
  %1385 = vmatpush.msra.mxu0 %v856
  %1386 = vmatpush.msra.mxu0 %v852
  %1387 = vmatpush.msra.mxu0 %v848
  %1388 = vmatpush.msra.mxu0 %v844
  %1389 = vmatpush.msra.mxu0 %v840
  %1390 = vmatpush.msra.mxu0 %v836
  %1391 = vmatpush.msra.mxu0 %v832
  %1392 = vmatpush.msra.mxu0 %v828
  %1393 = vmatmul.f32.gmra.mxu0 %v630
  %v1394 = vpop.f32.mrf.mxu0
  %v1395 = vadd.f32 %v1375, %v1394
  %1396 = vdwg.mxu0
  %1397 = vmatpush.msra.mxu0 %v952
  %1398 = vmatpush.msra.mxu0 %v948
  %1399 = vmatpush.msra.mxu0 %v944
  %1400 = vmatpush.msra.mxu0 %v940
  %1401 = vmatpush.msra.mxu0 %v936
  %1402 = vmatpush.msra.mxu0 %v932
  %1403 = vmatpush.msra.mxu0 %v928
  %1404 = vmatpush.msra.mxu0 %v924
  %1405 = vmatpush.msra.mxu0 %v920
  %1406 = vmatpush.msra.mxu0 %v916
  %1407 = vmatpush.msra.mxu0 %v912
  %1408 = vmatpush.msra.mxu0 %v908
  %1409 = vmatpush.msra.mxu0 %v904
  %1410 = vmatpush.msra.mxu0 %v900
  %1411 = vmatpush.msra.mxu0 %v896
  %1412 = vmatpush.msra.mxu0 %v892
  %1413 = vmatmul.f32.gmra.mxu0 %v631
  %v1414 = vpop.f32.mrf.mxu0
  %v1415 = vadd.f32 %v1395, %v1414
  %1416 = vdwg.mxu0
  %1417 = vmatpush.msra.mxu0 %v1016
  %1418 = vmatpush.msra.mxu0 %v1012
  %1419 = vmatpush.msra.mxu0 %v1008
  %1420 = vmatpush.msra.mxu0 %v1004
  %1421 = vmatpush.msra.mxu0 %v1000
  %1422 = vmatpush.msra.mxu0 %v996
  %1423 = vmatpush.msra.mxu0 %v992
  %1424 = vmatpush.msra.mxu0 %v988
  %1425 = vmatpush.msra.mxu0 %v984
  %1426 = vmatpush.msra.mxu0 %v980
  %1427 = vmatpush.msra.mxu0 %v976
  %1428 = vmatpush.msra.mxu0 %v972
  %1429 = vmatpush.msra.mxu0 %v968
  %1430 = vmatpush.msra.mxu0 %v964
  %1431 = vmatpush.msra.mxu0 %v960
  %1432 = vmatpush.msra.mxu0 %v956
  %1433 = vmatmul.f32.gmra.mxu0 %v632
  %v1434 = vpop.f32.mrf.mxu0
  %v1435 = vadd.f32 %v1415, %v1434
  %1436 = vdwg.mxu0
  %1437 = vmatpush.msra.mxu0 %v1080
  %1438 = vmatpush.msra.mxu0 %v1076
  %1439 = vmatpush.msra.mxu0 %v1072
  %1440 = vmatpush.msra.mxu0 %v1068
  %1441 = vmatpush.msra.mxu0 %v1064
  %1442 = vmatpush.msra.mxu0 %v1060
  %1443 = vmatpush.msra.mxu0 %v1056
  %1444 = vmatpush.msra.mxu0 %v1052
  %1445 = vmatpush.msra.mxu0 %v1048
  %1446 = vmatpush.msra.mxu0 %v1044
  %1447 = vmatpush.msra.mxu0 %v1040
  %1448 = vmatpush.msra.mxu0 %v1036
  %1449 = vmatpush.msra.mxu0 %v1032
  %1450 = vmatpush.msra.mxu0 %v1028
  %1451 = vmatpush.msra.mxu0 %v1024
  %1452 = vmatpush.msra.mxu0 %v1020
  %1453 = vmatmul.f32.gmra.mxu0 %v633
  %v1454 = vpop.f32.mrf.mxu0
  %v1455 = vadd.f32 %v1435, %v1454
  %1456 = vdwg.mxu0
  %1457 = vmatpush.msra.mxu0 %v1144
  %1458 = vmatpush.msra.mxu0 %v1140
  %1459 = vmatpush.msra.mxu0 %v1136
  %1460 = vmatpush.msra.mxu0 %v1132
  %1461 = vmatpush.msra.mxu0 %v1128
  %1462 = vmatpush.msra.mxu0 %v1124
  %1463 = vmatpush.msra.mxu0 %v1120
  %1464 = vmatpush.msra.mxu0 %v1116
  %1465 = vmatpush.msra.mxu0 %v1112
  %1466 = vmatpush.msra.mxu0 %v1108
  %1467 = vmatpush.msra.mxu0 %v1104
  %1468 = vmatpush.msra.mxu0 %v1100
  %1469 = vmatpush.msra.mxu0 %v1096
  %1470 = vmatpush.msra.mxu0 %v1092
  %1471 = vmatpush.msra.mxu0 %v1088
  %1472 = vmatpush.msra.mxu0 %v1084
  %1473 = vmatmul.f32.gmra.mxu0 %v634
  %v1474 = vpop.f32.mrf.mxu0
  %v1475 = vadd.f32 %v1455, %v1474
  %1476 = vdwg.mxu0
  %1477 = vmatpush.msra.mxu0 %v697
  %1478 = vmatpush.msra.mxu0 %v693
  %1479 = vmatpush.msra.mxu0 %v689
  %1480 = vmatpush.msra.mxu0 %v685
  %1481 = vmatpush.msra.mxu0 %v681
  %1482 = vmatpush.msra.mxu0 %v677
  %1483 = vmatpush.msra.mxu0 %v673
  %1484 = vmatpush.msra.mxu0 %v669
  %1485 = vmatpush.msra.mxu0 %v665
  %1486 = vmatpush.msra.mxu0 %v661
  %1487 = vmatpush.msra.mxu0 %v657
  %1488 = vmatpush.msra.mxu0 %v653
  %1489 = vmatpush.msra.mxu0 %v649
  %1490 = vmatpush.msra.mxu0 %v645
  %1491 = vmatpush.msra.mxu0 %v641
  %1492 = vmatpush.msra.mxu0 %v637
  %1493 = vmatmul.f32.gmra.mxu0 %v627
  %v1494 = vpop.f32.mrf.mxu0
  %v1495 = vadd.f32 %v1151, %v1494
  %1496 = vdwg.mxu0
  %1497 = vmatpush.msra.mxu0 %v761
  %1498 = vmatpush.msra.mxu0 %v757
  %1499 = vmatpush.msra.mxu0 %v753
  %1500 = vmatpush.msra.mxu0 %v749
  %1501 = vmatpush.msra.mxu0 %v745
  %1502 = vmatpush.msra.mxu0 %v741
  %1503 = vmatpush.msra.mxu0 %v737
  %1504 = vmatpush.msra.mxu0 %v733
  %1505 = vmatpush.msra.mxu0 %v729
  %1506 = vmatpush.msra.mxu0 %v725
  %1507 = vmatpush.msra.mxu0 %v721
  %1508 = vmatpush.msra.mxu0 %v717
  %1509 = vmatpush.msra.mxu0 %v713
  %1510 = vmatpush.msra.mxu0 %v709
  %1511 = vmatpush.msra.mxu0 %v705
  %1512 = vmatpush.msra.mxu0 %v701
  %1513 = vmatmul.f32.gmra.mxu0 %v628
  %v1514 = vpop.f32.mrf.mxu0
  %v1515 = vadd.f32 %v1495, %v1514
  %1516 = vdwg.mxu0
  %1517 = vmatpush.msra.mxu0 %v825
  %1518 = vmatpush.msra.mxu0 %v821
  %1519 = vmatpush.msra.mxu0 %v817
  %1520 = vmatpush.msra.mxu0 %v813
  %1521 = vmatpush.msra.mxu0 %v809
  %1522 = vmatpush.msra.mxu0 %v805
  %1523 = vmatpush.msra.mxu0 %v801
  %1524 = vmatpush.msra.mxu0 %v797
  %1525 = vmatpush.msra.mxu0 %v793
  %1526 = vmatpush.msra.mxu0 %v789
  %1527 = vmatpush.msra.mxu0 %v785
  %1528 = vmatpush.msra.mxu0 %v781
  %1529 = vmatpush.msra.mxu0 %v777
  %1530 = vmatpush.msra.mxu0 %v773
  %1531 = vmatpush.msra.mxu0 %v769
  %1532 = vmatpush.msra.mxu0 %v765
  %1533 = vmatmul.f32.gmra.mxu0 %v629
  %v1534 = vpop.f32.mrf.mxu0
  %v1535 = vadd.f32 %v1515, %v1534
  %1536 = vdwg.mxu0
  %1537 = vmatpush.msra.mxu0 %v889
  %1538 = vmatpush.msra.mxu0 %v885
  %1539 = vmatpush.msra.mxu0 %v881
  %1540 = vmatpush.msra.mxu0 %v877
  %1541 = vmatpush.msra.mxu0 %v873
  %1542 = vmatpush.msra.mxu0 %v869
  %1543 = vmatpush.msra.mxu0 %v865
  %1544 = vmatpush.msra.mxu0 %v861
  %1545 = vmatpush.msra.mxu0 %v857
  %1546 = vmatpush.msra.mxu0 %v853
  %1547 = vmatpush.msra.mxu0 %v849
  %1548 = vmatpush.msra.mxu0 %v845
  %1549 = vmatpush.msra.mxu0 %v841
  %1550 = vmatpush.msra.mxu0 %v837
  %1551 = vmatpush.msra.mxu0 %v833
  %1552 = vmatpush.msra.mxu0 %v829
  %1553 = vmatmul.f32.gmra.mxu0 %v630
  %v1554 = vpop.f32.mrf.mxu0
  %v1555 = vadd.f32 %v1535, %v1554
  %1556 = vdwg.mxu0
  %1557 = vmatpush.msra.mxu0 %v953
  %1558 = vmatpush.msra.mxu0 %v949
  %1559 = vmatpush.msra.mxu0 %v945
  %1560 = vmatpush.msra.mxu0 %v941
  %1561 = vmatpush.msra.mxu0 %v937
  %1562 = vmatpush.msra.mxu0 %v933
  %1563 = vmatpush.msra.mxu0 %v929
  %1564 = vmatpush.msra.mxu0 %v925
  %1565 = vmatpush.msra.mxu0 %v921
  %1566 = vmatpush.msra.mxu0 %v917
  %1567 = vmatpush.msra.mxu0 %v913
  %1568 = vmatpush.msra.mxu0 %v909
  %1569 = vmatpush.msra.mxu0 %v905
  %1570 = vmatpush.msra.mxu0 %v901
  %1571 = vmatpush.msra.mxu0 %v897
  %1572 = vmatpush.msra.mxu0 %v893
  %1573 = vmatmul.f32.gmra.mxu0 %v631
  %v1574 = vpop.f32.mrf.mxu0
  %v1575 = vadd.f32 %v1555, %v1574
  %1576 = vdwg.mxu0
  %1577 = vmatpush.msra.mxu0 %v1017
  %1578 = vmatpush.msra.mxu0 %v1013
  %1579 = vmatpush.msra.mxu0 %v1009
  %1580 = vmatpush.msra.mxu0 %v1005
  %1581 = vmatpush.msra.mxu0 %v1001
  %1582 = vmatpush.msra.mxu0 %v997
  %1583 = vmatpush.msra.mxu0 %v993
  %1584 = vmatpush.msra.mxu0 %v989
  %1585 = vmatpush.msra.mxu0 %v985
  %1586 = vmatpush.msra.mxu0 %v981
  %1587 = vmatpush.msra.mxu0 %v977
  %1588 = vmatpush.msra.mxu0 %v973
  %1589 = vmatpush.msra.mxu0 %v969
  %1590 = vmatpush.msra.mxu0 %v965
  %1591 = vmatpush.msra.mxu0 %v961
  %1592 = vmatpush.msra.mxu0 %v957
  %1593 = vmatmul.f32.gmra.mxu0 %v632
  %v1594 = vpop.f32.mrf.mxu0
  %v1595 = vadd.f32 %v1575, %v1594
  %1596 = vdwg.mxu0
  %1597 = vmatpush.msra.mxu0 %v1081
  %1598 = vmatpush.msra.mxu0 %v1077
  %1599 = vmatpush.msra.mxu0 %v1073
  %1600 = vmatpush.msra.mxu0 %v1069
  %1601 = vmatpush.msra.mxu0 %v1065
  %1602 = vmatpush.msra.mxu0 %v1061
  %1603 = vmatpush.msra.mxu0 %v1057
  %1604 = vmatpush.msra.mxu0 %v1053
  %1605 = vmatpush.msra.mxu0 %v1049
  %1606 = vmatpush.msra.mxu0 %v1045
  %1607 = vmatpush.msra.mxu0 %v1041
  %1608 = vmatpush.msra.mxu0 %v1037
  %1609 = vmatpush.msra.mxu0 %v1033
  %1610 = vmatpush.msra.mxu0 %v1029
  %1611 = vmatpush.msra.mxu0 %v1025
  %1612 = vmatpush.msra.mxu0 %v1021
  %1613 = vmatmul.f32.gmra.mxu0 %v633
  %v1614 = vpop.f32.mrf.mxu0
  %v1615 = vadd.f32 %v1595, %v1614
  %1616 = vdwg.mxu0
  %1617 = vmatpush.msra.mxu0 %v1145
  %1618 = vmatpush.msra.mxu0 %v1141
  %1619 = vmatpush.msra.mxu0 %v1137
  %1620 = vmatpush.msra.mxu0 %v1133
  %1621 = vmatpush.msra.mxu0 %v1129
  %1622 = vmatpush.msra.mxu0 %v1125
  %1623 = vmatpush.msra.mxu0 %v1121
  %1624 = vmatpush.msra.mxu0 %v1117
  %1625 = vmatpush.msra.mxu0 %v1113
  %1626 = vmatpush.msra.mxu0 %v1109
  %1627 = vmatpush.msra.mxu0 %v1105
  %1628 = vmatpush.msra.mxu0 %v1101
  %1629 = vmatpush.msra.mxu0 %v1097
  %1630 = vmatpush.msra.mxu0 %v1093
  %1631 = vmatpush.msra.mxu0 %v1089
  %1632 = vmatpush.msra.mxu0 %v1085
  %1633 = vmatmul.f32.gmra.mxu0 %v634
  %v1634 = vpop.f32.mrf.mxu0
  %v1635 = vadd.f32 %v1615, %v1634
  %1636 = vdwg.mxu0
  %1637 = vmatpush.msra.mxu0 %v698
  %1638 = vmatpush.msra.mxu0 %v694
  %1639 = vmatpush.msra.mxu0 %v690
  %1640 = vmatpush.msra.mxu0 %v686
  %1641 = vmatpush.msra.mxu0 %v682
  %1642 = vmatpush.msra.mxu0 %v678
  %1643 = vmatpush.msra.mxu0 %v674
  %1644 = vmatpush.msra.mxu0 %v670
  %1645 = vmatpush.msra.mxu0 %v666
  %1646 = vmatpush.msra.mxu0 %v662
  %1647 = vmatpush.msra.mxu0 %v658
  %1648 = vmatpush.msra.mxu0 %v654
  %1649 = vmatpush.msra.mxu0 %v650
  %1650 = vmatpush.msra.mxu0 %v646
  %1651 = vmatpush.msra.mxu0 %v642
  %1652 = vmatpush.msra.mxu0 %v638
  %1653 = vmatmul.f32.gmra.mxu0 %v627
  %v1654 = vpop.f32.mrf.mxu0
  %v1655 = vadd.f32 %v1152, %v1654
  %1656 = vdwg.mxu0
  %1657 = vmatpush.msra.mxu0 %v762
  %1658 = vmatpush.msra.mxu0 %v758
  %1659 = vmatpush.msra.mxu0 %v754
  %1660 = vmatpush.msra.mxu0 %v750
  %1661 = vmatpush.msra.mxu0 %v746
  %1662 = vmatpush.msra.mxu0 %v742
  %1663 = vmatpush.msra.mxu0 %v738
  %1664 = vmatpush.msra.mxu0 %v734
  %1665 = vmatpush.msra.mxu0 %v730
  %1666 = vmatpush.msra.mxu0 %v726
  %1667 = vmatpush.msra.mxu0 %v722
  %1668 = vmatpush.msra.mxu0 %v718
  %1669 = vmatpush.msra.mxu0 %v714
  %1670 = vmatpush.msra.mxu0 %v710
  %1671 = vmatpush.msra.mxu0 %v706
  %1672 = vmatpush.msra.mxu0 %v702
  %1673 = vmatmul.f32.gmra.mxu0 %v628
  %v1674 = vpop.f32.mrf.mxu0
  %v1675 = vadd.f32 %v1655, %v1674
  %1676 = vdwg.mxu0
  %1677 = vmatpush.msra.mxu0 %v826
  %1678 = vmatpush.msra.mxu0 %v822
  %1679 = vmatpush.msra.mxu0 %v818
  %1680 = vmatpush.msra.mxu0 %v814
  %1681 = vmatpush.msra.mxu0 %v810
  %1682 = vmatpush.msra.mxu0 %v806
  %1683 = vmatpush.msra.mxu0 %v802
  %1684 = vmatpush.msra.mxu0 %v798
  %1685 = vmatpush.msra.mxu0 %v794
  %1686 = vmatpush.msra.mxu0 %v790
  %1687 = vmatpush.msra.mxu0 %v786
  %1688 = vmatpush.msra.mxu0 %v782
  %1689 = vmatpush.msra.mxu0 %v778
  %1690 = vmatpush.msra.mxu0 %v774
  %1691 = vmatpush.msra.mxu0 %v770
  %1692 = vmatpush.msra.mxu0 %v766
  %1693 = vmatmul.f32.gmra.mxu0 %v629
  %v1694 = vpop.f32.mrf.mxu0
  %v1695 = vadd.f32 %v1675, %v1694
  %1696 = vdwg.mxu0
  %1697 = vmatpush.msra.mxu0 %v890
  %1698 = vmatpush.msra.mxu0 %v886
  %1699 = vmatpush.msra.mxu0 %v882
  %1700 = vmatpush.msra.mxu0 %v878
  %1701 = vmatpush.msra.mxu0 %v874
  %1702 = vmatpush.msra.mxu0 %v870
  %1703 = vmatpush.msra.mxu0 %v866
  %1704 = vmatpush.msra.mxu0 %v862
  %1705 = vmatpush.msra.mxu0 %v858
  %1706 = vmatpush.msra.mxu0 %v854
  %1707 = vmatpush.msra.mxu0 %v850
  %1708 = vmatpush.msra.mxu0 %v846
  %1709 = vmatpush.msra.mxu0 %v842
  %1710 = vmatpush.msra.mxu0 %v838
  %1711 = vmatpush.msra.mxu0 %v834
  %1712 = vmatpush.msra.mxu0 %v830
  %1713 = vmatmul.f32.gmra.mxu0 %v630
  %v1714 = vpop.f32.mrf.mxu0
  %v1715 = vadd.f32 %v1695, %v1714
  %1716 = vdwg.mxu0
  %1717 = vmatpush.msra.mxu0 %v954
  %1718 = vmatpush.msra.mxu0 %v950
  %1719 = vmatpush.msra.mxu0 %v946
  %1720 = vmatpush.msra.mxu0 %v942
  %1721 = vmatpush.msra.mxu0 %v938
  %1722 = vmatpush.msra.mxu0 %v934
  %1723 = vmatpush.msra.mxu0 %v930
  %1724 = vmatpush.msra.mxu0 %v926
  %1725 = vmatpush.msra.mxu0 %v922
  %1726 = vmatpush.msra.mxu0 %v918
  %1727 = vmatpush.msra.mxu0 %v914
  %1728 = vmatpush.msra.mxu0 %v910
  %1729 = vmatpush.msra.mxu0 %v906
  %1730 = vmatpush.msra.mxu0 %v902
  %1731 = vmatpush.msra.mxu0 %v898
  %1732 = vmatpush.msra.mxu0 %v894
  %1733 = vmatmul.f32.gmra.mxu0 %v631
  %v1734 = vpop.f32.mrf.mxu0
  %v1735 = vadd.f32 %v1715, %v1734
  %1736 = vdwg.mxu0
  %1737 = vmatpush.msra.mxu0 %v1018
  %1738 = vmatpush.msra.mxu0 %v1014
  %1739 = vmatpush.msra.mxu0 %v1010
  %1740 = vmatpush.msra.mxu0 %v1006
  %1741 = vmatpush.msra.mxu0 %v1002
  %1742 = vmatpush.msra.mxu0 %v998
  %1743 = vmatpush.msra.mxu0 %v994
  %1744 = vmatpush.msra.mxu0 %v990
  %1745 = vmatpush.msra.mxu0 %v986
  %1746 = vmatpush.msra.mxu0 %v982
  %1747 = vmatpush.msra.mxu0 %v978
  %1748 = vmatpush.msra.mxu0 %v974
  %1749 = vmatpush.msra.mxu0 %v970
  %1750 = vmatpush.msra.mxu0 %v966
  %1751 = vmatpush.msra.mxu0 %v962
  %1752 = vmatpush.msra.mxu0 %v958
  %1753 = vmatmul.f32.gmra.mxu0 %v632
  %v1754 = vpop.f32.mrf.mxu0
  %v1755 = vadd.f32 %v1735, %v1754
  %1756 = vdwg.mxu0
  %1757 = vmatpush.msra.mxu0 %v1082
  %1758 = vmatpush.msra.mxu0 %v1078
  %1759 = vmatpush.msra.mxu0 %v1074
  %1760 = vmatpush.msra.mxu0 %v1070
  %1761 = vmatpush.msra.mxu0 %v1066
  %1762 = vmatpush.msra.mxu0 %v1062
  %1763 = vmatpush.msra.mxu0 %v1058
  %1764 = vmatpush.msra.mxu0 %v1054
  %1765 = vmatpush.msra.mxu0 %v1050
  %1766 = vmatpush.msra.mxu0 %v1046
  %1767 = vmatpush.msra.mxu0 %v1042
  %1768 = vmatpush.msra.mxu0 %v1038
  %1769 = vmatpush.msra.mxu0 %v1034
  %1770 = vmatpush.msra.mxu0 %v1030
  %1771 = vmatpush.msra.mxu0 %v1026
  %1772 = vmatpush.msra.mxu0 %v1022
  %1773 = vmatmul.f32.gmra.mxu0 %v633
  %v1774 = vpop.f32.mrf.mxu0
  %v1775 = vadd.f32 %v1755, %v1774
  %1776 = vdwg.mxu0
  %1777 = vmatpush.msra.mxu0 %v1146
  %1778 = vmatpush.msra.mxu0 %v1142
  %1779 = vmatpush.msra.mxu0 %v1138
  %1780 = vmatpush.msra.mxu0 %v1134
  %1781 = vmatpush.msra.mxu0 %v1130
  %1782 = vmatpush.msra.mxu0 %v1126
  %1783 = vmatpush.msra.mxu0 %v1122
  %1784 = vmatpush.msra.mxu0 %v1118
  %1785 = vmatpush.msra.mxu0 %v1114
  %1786 = vmatpush.msra.mxu0 %v1110
  %1787 = vmatpush.msra.mxu0 %v1106
  %1788 = vmatpush.msra.mxu0 %v1102
  %1789 = vmatpush.msra.mxu0 %v1098
  %1790 = vmatpush.msra.mxu0 %v1094
  %1791 = vmatpush.msra.mxu0 %v1090
  %1792 = vmatpush.msra.mxu0 %v1086
  %1793 = vmatmul.f32.gmra.mxu0 %v634
  %v1794 = vpop.f32.mrf.mxu0
  %v1795 = vadd.f32 %v1775, %v1794
  %1796 = vdwg.mxu0
  %v1797 = vmax.f32 %v1315, 0.0
  %v1798 = vmax.f32 %v1475, 0.0
  %v1799 = vmax.f32 %v1635, 0.0
  %v1800 = vmax.f32 %v1795, 0.0
  %v1801 = vld [vmem:[%s5] sm:$0xff]
  %v1802 = vld [vmem:[%s5 + $0x8] sm:$0xff]
  %v1803 = vld [vmem:[%s5 + $0x10] sm:$0xff]
  %v1804 = vld [vmem:[%s5 + $0x18] sm:$0xff]
  %v1805 = vld [vmem:[%s5 + $0x20] sm:$0xff]
  %v1806 = vld [vmem:[%s5 + $0x28] sm:$0xff]
  %v1807 = vld [vmem:[%s5 + $0x30] sm:$0xff]
  %v1808 = vld [vmem:[%s5 + $0x38] sm:$0xff]
  %v1809 = vld [vmem:[%s5 + $0x40] sm:$0xff]
  %v1810 = vld [vmem:[%s5 + $0x48] sm:$0xff]
  %v1811 = vld [vmem:[%s5 + $0x50] sm:$0xff]
  %v1812 = vld [vmem:[%s5 + $0x58] sm:$0xff]
  %v1813 = vld [vmem:[%s5 + $0x60] sm:$0xff]
  %v1814 = vld [vmem:[%s5 + $0x68] sm:$0xff]
  %v1815 = vld [vmem:[%s5 + $0x70] sm:$0xff]
  %v1816 = vld [vmem:[%s5 + $0x78] sm:$0xff]
  %v1817 = vld [vmem:[%s5 + $0x80] sm:$0xff]
  %v1818 = vld [vmem:[%s5 + $0x88] sm:$0xff]
  %v1819 = vld [vmem:[%s5 + $0x90] sm:$0xff]
  %v1820 = vld [vmem:[%s5 + $0x98] sm:$0xff]
  %v1821 = vld [vmem:[%s5 + $0xa0] sm:$0xff]
  %v1822 = vld [vmem:[%s5 + $0xa8] sm:$0xff]
  %v1823 = vld [vmem:[%s5 + $0xb0] sm:$0xff]
  %v1824 = vld [vmem:[%s5 + $0xb8] sm:$0xff]
  %v1825 = vld [vmem:[%s5 + $0xc0] sm:$0xff]
  %v1826 = vld [vmem:[%s5 + $0xc8] sm:$0xff]
  %v1827 = vld [vmem:[%s5 + $0xd0] sm:$0xff]
  %v1828 = vld [vmem:[%s5 + $0xd8] sm:$0xff]
  %v1829 = vld [vmem:[%s5 + $0xe0] sm:$0xff]
  %v1830 = vld [vmem:[%s5 + $0xe8] sm:$0xff]
  %v1831 = vld [vmem:[%s5 + $0xf0] sm:$0xff]
  %v1832 = vld [vmem:[%s5 + $0xf8] sm:$0xff]
  %v1833 = vld [vmem:[%s5 + $0x100] sm:$0xff]
  %v1834 = vld [vmem:[%s5 + $0x108] sm:$0xff]
  %v1835 = vld [vmem:[%s5 + $0x110] sm:$0xff]
  %v1836 = vld [vmem:[%s5 + $0x118] sm:$0xff]
  %v1837 = vld [vmem:[%s5 + $0x120] sm:$0xff]
  %v1838 = vld [vmem:[%s5 + $0x128] sm:$0xff]
  %v1839 = vld [vmem:[%s5 + $0x130] sm:$0xff]
  %v1840 = vld [vmem:[%s5 + $0x138] sm:$0xff]
  %v1841 = vld [vmem:[%s5 + $0x140] sm:$0xff]
  %v1842 = vld [vmem:[%s5 + $0x148] sm:$0xff]
  %v1843 = vld [vmem:[%s5 + $0x150] sm:$0xff]
  %v1844 = vld [vmem:[%s5 + $0x158] sm:$0xff]
  %v1845 = vld [vmem:[%s5 + $0x160] sm:$0xff]
  %v1846 = vld [vmem:[%s5 + $0x168] sm:$0xff]
  %v1847 = vld [vmem:[%s5 + $0x170] sm:$0xff]
  %v1848 = vld [vmem:[%s5 + $0x178] sm:$0xff]
  %v1849 = vld [vmem:[%s5 + $0x180] sm:$0xff]
  %v1850 = vld [vmem:[%s5 + $0x188] sm:$0xff]
  %v1851 = vld [vmem:[%s5 + $0x190] sm:$0xff]
  %v1852 = vld [vmem:[%s5 + $0x198] sm:$0xff]
  %v1853 = vld [vmem:[%s5 + $0x1a0] sm:$0xff]
  %v1854 = vld [vmem:[%s5 + $0x1a8] sm:$0xff]
  %v1855 = vld [vmem:[%s5 + $0x1b0] sm:$0xff]
  %v1856 = vld [vmem:[%s5 + $0x1b8] sm:$0xff]
  %v1857 = vld [vmem:[%s5 + $0x1c0] sm:$0xff]
  %v1858 = vld [vmem:[%s5 + $0x1c8] sm:$0xff]
  %v1859 = vld [vmem:[%s5 + $0x1d0] sm:$0xff]
  %v1860 = vld [vmem:[%s5 + $0x1d8] sm:$0xff]
  %v1861 = vld [vmem:[%s5 + $0x1e0] sm:$0xff]
  %v1862 = vld [vmem:[%s5 + $0x1e8] sm:$0xff]
  %v1863 = vld [vmem:[%s5 + $0x1f0] sm:$0xff]
  %v1864 = vld [vmem:[%s5 + $0x1f8] sm:$0xff]
  %v1865 = vld [vmem:[%s6] sm:$0x1]
  %v1867 = vperm.slane %v1865, 0
  %1869 = vmatpush.msra.mxu0 %v1816
  %1870 = vmatpush.msra.mxu0 %v1815
  %1871 = vmatpush.msra.mxu0 %v1814
  %1872 = vmatpush.msra.mxu0 %v1813
  %1873 = vmatpush.msra.mxu0 %v1812
  %1874 = vmatpush.msra.mxu0 %v1811
  %1875 = vmatpush.msra.mxu0 %v1810
  %1876 = vmatpush.msra.mxu0 %v1809
  %1877 = vmatpush.msra.mxu0 %v1808
  %1878 = vmatpush.msra.mxu0 %v1807
  %1879 = vmatpush.msra.mxu0 %v1806
  %1880 = vmatpush.msra.mxu0 %v1805
  %1881 = vmatpush.msra.mxu0 %v1804
  %1882 = vmatpush.msra.mxu0 %v1803
  %1883 = vmatpush.msra.mxu0 %v1802
  %1884 = vmatpush.msra.mxu0 %v1801
  %1885 = vmatmul.f32.gmra.mxu0 %v1797
  %v1886 = vpop.f32.mrf.mxu0
  %v1887 = vadd.f32 %v1867, %v1886
  %1888 = vdwg.mxu0
  %1889 = vmatpush.msra.mxu0 %v1832
  %1890 = vmatpush.msra.mxu0 %v1831
  %1891 = vmatpush.msra.mxu0 %v1830
  %1892 = vmatpush.msra.mxu0 %v1829
  %1893 = vmatpush.msra.mxu0 %v1828
  %1894 = vmatpush.msra.mxu0 %v1827
  %1895 = vmatpush.msra.mxu0 %v1826
  %1896 = vmatpush.msra.mxu0 %v1825
  %1897 = vmatpush.msra.mxu0 %v1824
  %1898 = vmatpush.msra.mxu0 %v1823
  %1899 = vmatpush.msra.mxu0 %v1822
  %1900 = vmatpush.msra.mxu0 %v1821
  %1901 = vmatpush.msra.mxu0 %v1820
  %1902 = vmatpush.msra.mxu0 %v1819
  %1903 = vmatpush.msra.mxu0 %v1818
  %1904 = vmatpush.msra.mxu0 %v1817
  %1905 = vmatmul.f32.gmra.mxu0 %v1798
  %v1906 = vpop.f32.mrf.mxu0
  %v1907 = vadd.f32 %v1887, %v1906
  %1908 = vdwg.mxu0
  %1909 = vmatpush.msra.mxu0 %v1848
  %1910 = vmatpush.msra.mxu0 %v1847
  %1911 = vmatpush.msra.mxu0 %v1846
  %1912 = vmatpush.msra.mxu0 %v1845
  %1913 = vmatpush.msra.mxu0 %v1844
  %1914 = vmatpush.msra.mxu0 %v1843
  %1915 = vmatpush.msra.mxu0 %v1842
  %1916 = vmatpush.msra.mxu0 %v1841
  %1917 = vmatpush.msra.mxu0 %v1840
  %1918 = vmatpush.msra.mxu0 %v1839
  %1919 = vmatpush.msra.mxu0 %v1838
  %1920 = vmatpush.msra.mxu0 %v1837
  %1921 = vmatpush.msra.mxu0 %v1836
  %1922 = vmatpush.msra.mxu0 %v1835
  %1923 = vmatpush.msra.mxu0 %v1834
  %1924 = vmatpush.msra.mxu0 %v1833
  %1925 = vmatmul.f32.gmra.mxu0 %v1799
  %v1926 = vpop.f32.mrf.mxu0
  %v1927 = vadd.f32 %v1907, %v1926
  %1928 = vdwg.mxu0
  %1929 = vmatpush.msra.mxu0 %v1864
  %1930 = vmatpush.msra.mxu0 %v1863
  %1931 = vmatpush.msra.mxu0 %v1862
  %1932 = vmatpush.msra.mxu0 %v1861
  %1933 = vmatpush.msra.mxu0 %v1860
  %1934 = vmatpush.msra.mxu0 %v1859
  %1935 = vmatpush.msra.mxu0 %v1858
  %1936 = vmatpush.msra.mxu0 %v1857
  %1937 = vmatpush.msra.mxu0 %v1856
  %1938 = vmatpush.msra.mxu0 %v1855
  %1939 = vmatpush.msra.mxu0 %v1854
  %1940 = vmatpush.msra.mxu0 %v1853
  %1941 = vmatpush.msra.mxu0 %v1852
  %1942 = vmatpush.msra.mxu0 %v1851
  %1943 = vmatpush.msra.mxu0 %v1850
  %1944 = vmatpush.msra.mxu0 %v1849
  %1945 = vmatmul.f32.gmra.mxu0 %v1800
  %v1946 = vpop.f32.mrf.mxu0
  %v1947 = vadd.f32 %v1927, %v1946
  %1948 = vdwg.mxu0
  %1949 = vst [vmem:[%s7] sm:$0x3] %v1947
  // Predicated region
  $region30: #{content_encoder_forward.1} parent=0 // pred_check
    _
  $region31: #{content_encoder_forward.1} parent=0 // pred_check_branch
    %1951 = sbr.rel (0) target = $region33
  $region32: #{content_encoder_forward.1} parent=0 // pred_region
    _
  $region33: #{content_encoder_forward.1} parent=0 // pred_fallthru
    _
  // Predicated region
  $region34: #{content_encoder_forward.1} parent=0 // pred_check
    _
  $region35: #{content_encoder_forward.1} parent=0 // pred_check_branch
    %1953 = sbr.rel (0) target = $region37
  $region36: #{content_encoder_forward.1} parent=0 // pred_region
    _
  $region37: #{content_encoder_forward.1} parent=0 // pred_fallthru
    _

</llo_original>
